<compile_context>
chip_gen: v6e
topology: v6e:2x2x1
jax: 0.10.0
libtpu: 0.0.40
codegen_flags: <defaults>
</compile_context>

<pallas_src>
import math
from functools import partial

import jax
import jax.numpy as jnp
from jax import lax
from jax.experimental import pallas as pl
from jax.experimental.pallas import tpu as pltpu

_VMEM_LIMIT = 48 * 1024 * 1024   # explicit scoped-VMEM budget (fits v7x's 64 MiB physical)


# --------------------- Kernel A: sketch -> importance probabilities ---------------------
def _sketch_kernel(k_ref, v_ref, qs0_ref, mv_ref, mrs_ref, prob_ref, vsum_ref):
    # k_ref:   (1, th, N, P)   raw k (row mask folded into mrs downstream)
    # v_ref:   (1, th, N, P)   raw v
    # qs0_ref: (1, th, NBF, P) gathered q rows * mask[S0] * data_normalizer^2
    # mv_ref:  (1, N, 1)       mask column (masks v rows)
    # mrs_ref: (1, 1, N)       mask * sqrt(non_padding / nbf)   (lane vector)
    k_b = k_ref[0].astype(jnp.bfloat16)                               # (th, N, P)
    qs0_b = qs0_ref[0].astype(jnp.bfloat16)                           # (th, NBF, P)

    # N on the lane axis: (th, NBF, N)
    prod = jnp.einsum('hdp,hnp->hdn', qs0_b, k_b,
                      preferred_element_type=jnp.float32)
    ats0 = jnp.exp(prod) * mrs_ref[0]                                 # lane-dense exp / mul
    colsum = jnp.sum(ats0, axis=-1, keepdims=True)                    # (th, NBF, 1) lane reduce
    dinv = 1.0 / colsum                                               # exact (approx recip failed 1e-3)
    da = dinv * ats0
    row = jnp.sum(da * da, axis=1)                                    # (th, N) sublane reduce

    vm = v_ref[0] * mv_ref[0]                                         # masked v, (th, N, P)
    vsq = jnp.sum(vm * vm, axis=-1)                                   # (th, N)
    prob_ref[0] = jnp.sqrt(row * vsq)[:, None, :]                     # lane-dense (th, 1, N)
    vsum_ref[0] = jnp.sum(vm, axis=1)[:, :, None]                     # (th, P, 1)


def sketch_pallas(k, v, qs0, mv, mrs, *, th=1):
    b, h, n, p = k.shape
    nbf = qs0.shape[2]
    assert h % th == 0
    grid = (b, h // th)

    spec_kv = pl.BlockSpec((1, th, n, p), lambda i, j: (i, j, 0, 0))
    spec_q0 = pl.BlockSpec((1, th, nbf, p), lambda i, j: (i, j, 0, 0))
    spec_mv = pl.BlockSpec((1, n, 1), lambda i, j: (i, 0, 0))
    spec_mrs = pl.BlockSpec((1, 1, n), lambda i, j: (i, 0, 0))

    cost = pl.CostEstimate(
        flops=2 * b * h * nbf * n * p + 4 * b * h * nbf * n + 3 * b * h * n * p,
        transcendentals=b * h * nbf * n + b * h * n,
        bytes_accessed=4 * (2 * b * h * n * p + b * h * nbf * p + 2 * b * n
                            + b * h * n + b * h * p))

    return pl.pallas_call(
        _sketch_kernel,
        grid=grid,
        in_specs=[spec_kv, spec_kv, spec_q0, spec_mv, spec_mrs],
        out_specs=[pl.BlockSpec((1, th, 1, n), lambda i, j: (i, j, 0, 0)),
                   pl.BlockSpec((1, th, p, 1), lambda i, j: (i, j, 0, 0))],
        out_shape=[jax.ShapeDtypeStruct((b, h, 1, n), jnp.float32),
                   jax.ShapeDtypeStruct((b, h, p, 1), jnp.float32)],
        compiler_params=pltpu.CompilerParams(
            dimension_semantics=("parallel", "parallel"),
            vmem_limit_bytes=_VMEM_LIMIT),
        cost_estimate=cost,
    )(k, v, qs0, mv, mrs)


# --------------------- Kernel B: sketched attention output ---------------------
def _attn_kernel(q_ref, mrow_ref, k1_ref, s1tv_ref, vsum_ref, c_ref, out_ref):
    # q_ref:    (1, H, tq, P)  raw q (mask applied lane-dense on logits)
    # mrow_ref: (1, 1, tq)     mask lane vector for these query rows
    # k1_ref:   (1, H, M, P)   gathered k rows * mask * data_normalizer^2
    # s1tv_ref: (1, H, M, P)   gathered v rows * mask
    # vsum_ref: (1, H, P, 1)   sum_n v*mask
    # c_ref:    (B,) in SMEM   non_padding - nb_features
    # out_ref:  (1, H, P, tq)  output with N on lanes (wrapper transposes back)
    c = c_ref[pl.program_id(0)]
    q_b = q_ref[0].astype(jnp.bfloat16)                               # (H, tq, P)
    k1_b = k1_ref[0].astype(jnp.bfloat16)                             # (H, M, P)
    s1tv = s1tv_ref[0]                                                # (H, M, P)  f32

    # N (query rows) on the lane axis: (H, M, tq)
    logits = jnp.einsum('hmp,hnp->hmn', k1_b, q_b,
                        preferred_element_type=jnp.float32)
    logits = logits * mrow_ref[0]                                     # lane-dense row mask
    e = jnp.exp(logits)                                               # (H, M, tq)
    a1_sum = jnp.sum(e, axis=1, keepdims=True)                        # (H, 1, tq)
    inv_m = 1.0 / logits.shape[1]
    mc = jnp.exp(jnp.sum(logits, axis=1, keepdims=True) * inv_m)      # (H, 1, tq) model_column

    av1_t = jnp.einsum('hmn,hmp->hpn', e.astype(jnp.bfloat16),
                       s1tv.astype(jnp.bfloat16),
                       preferred_element_type=jnp.float32)            # (H, P, tq)

    s1tv_sum = jnp.sum(s1tv, axis=1)[:, :, None]                      # (H, P, 1)
    num = av1_t + mc * (vsum_ref[0] - s1tv_sum)                       # (H, P, tq)
    d1 = a1_sum + mc * c                                              # (H, 1, tq)
    out_ref[0] = (num * (1.0 / d1)).astype(out_ref.dtype)             # exact divide, lane-dense store


def attn_pallas(q, mrow, k1, s1tv, vsum, c, *, tq=None):
    b, h, n, p = q.shape
    m = k1.shape[2]
    if tq is None:
        tq = n if n <= 512 else 512                                   # lane-multiple row tile
    assert n % tq == 0
    grid = (b, n // tq)

    spec_q = pl.BlockSpec((1, h, tq, p), lambda i, j: (i, 0, j, 0))
    spec_mrow = pl.BlockSpec((1, 1, tq), lambda i, j: (i, 0, j))
    spec_g = pl.BlockSpec((1, h, m, p), lambda i, j: (i, 0, 0, 0))
    spec_vs = pl.BlockSpec((1, h, p, 1), lambda i, j: (i, 0, 0, 0))
    spec_c = pl.BlockSpec(memory_space=pltpu.MemorySpace.SMEM)
    spec_out = pl.BlockSpec((1, h, p, tq), lambda i, j: (i, 0, 0, j))

    cost = pl.CostEstimate(
        flops=4 * b * h * n * m * p + 6 * b * h * n * m + 4 * b * h * n * p,
        transcendentals=b * h * n * m + b * h * n,
        bytes_accessed=4 * (2 * b * h * n * p + 2 * b * h * m * p + b * h * p + b * n + b))

    return pl.pallas_call(
        _attn_kernel,
        grid=grid,
        in_specs=[spec_q, spec_mrow, spec_g, spec_g, spec_vs, spec_c],
        out_specs=spec_out,
        out_shape=jax.ShapeDtypeStruct((b, h, p, n), jnp.float32),
        compiler_params=pltpu.CompilerParams(
            dimension_semantics=("parallel", "parallel"),
            vmem_limit_bytes=_VMEM_LIMIT),
        cost_estimate=cost,
    )(q, mrow, k1, s1tv, vsum, c)


# ------------------------------ full forward pass ------------------------------
@partial(jax.jit, static_argnums=(5, 6))
def skein_forward(q, k, v, mask, key, nb_features, accumulation):
    b, h, n, p = q.shape
    dn2 = 1.0 / math.sqrt(p)                          # data_normalizer ** 2
    maskf = mask.astype(jnp.float32)
    non_padding = jnp.sum(maskf, axis=-1)             # (B,)

    key_u, key_g = jax.random.split(key)

    # ---- uniform sketching: one U[0,1) draw shared over batch, scaled per batch
    #      (exactly as torch.rand(1, nbf) + einsum('b,md->bmd', ...)) ----
    u0 = jax.random.uniform(key_u, (1, nb_features), jnp.float32)
    S0 = (non_padding[:, None] * u0).astype(jnp.int32)               # (B, NBF)
    rs0 = jnp.sqrt(non_padding / 1.0 / nb_features)                  # (B,)

    # tiny gather of NBF q rows per head; fold mask[S0] and dn^2 here (no prep kernel)
    qs0_mask = jnp.take_along_axis(maskf, S0, axis=1)                # (B, NBF)
    QS0 = jnp.take_along_axis(q, S0[:, None, :, None], axis=2)       # (B, H, NBF, P)
    QS0 = QS0 * (qs0_mask[:, None, :, None] * dn2)

    mv = maskf[:, :, None]                                           # (B, N, 1)
    mrs = (maskf * rs0[:, None])[:, None, :]                         # (B, 1, N)  lane vector

    # ---- Kernel A: importance probabilities (lane-dense) + masked v row-sum ----
    prob4, vsum4 = sketch_pallas(k, v, QS0, mv, mrs)                 # (B,H,1,N), (B,H,P,1)
    prob = prob4[:, :, 0, :]                                         # (B, H, N)

    # ---- importance sketching: multinomial w/o replacement == Gumbel top-k ----
    w = prob / jnp.sum(prob, axis=-1, keepdims=True)
    g = jax.random.gumbel(key_g, (b, h, n), jnp.float32)
    scores = jnp.where(w > 0, jnp.log(w), -jnp.inf) + g
    m_tot = accumulation * nb_features
    _, s1_flat = lax.top_k(scores, m_tot)                            # (B, H, M)
    S1 = s1_flat.reshape(b, h, accumulation, nb_features)

    # tiny gathers of M = accumulation*NBF rows of raw k and v; fold mask (+dn^2 for k)
    gidx = s1_flat[..., None]                                        # (B, H, M, 1)
    g_mask = jnp.take_along_axis(
        jnp.broadcast_to(maskf[:, None, :], (b, h, n)), s1_flat, axis=2)[..., None]
    K1 = jnp.take_along_axis(k, gidx, axis=2) * (g_mask * dn2)       # (B, H, M, P)
    S1TV = jnp.take_along_axis(v, gidx, axis=2) * g_mask             # (B, H, M, P)

    c = non_padding - jnp.float32(nb_features)                       # (B,)
    mrow = maskf[:, None, :]                                         # (B, 1, N)

    # ---- Kernel B: sketched attention output, lane-dense (B,H,P,N) slab ----
    out_t = attn_pallas(q, mrow, K1, S1TV, vsum4, c)                 # (B, H, P, N)
    out = jnp.swapaxes(out_t, 2, 3)                                  # (B, H, N, P)
    aux = dict(S0b=S0, rs0=rs0, S1=S1, prob=prob)
    return out, aux


# ------------------------ pure-JAX reference (for checking) ------------------------
def reference(q, k, v, mask, S0b, rs0, S1, nb_features, accumulation):
    b, h, n, p = q.shape
    dn = p ** (-0.25)
    mf = mask.astype(jnp.float32)[:, None, :, None]                  # (B,1,N,1)
    qm = q * mf * dn
    km = k * mf * dn
    vm = v * mf
    non_padding = mask.astype(jnp.float32).sum(-1)                   # (B,)

    QS0 = jnp.take_along_axis(qm, S0b[:, None, :, None], axis=2)     # (B,H,NBF,P)
    prod = jnp.einsum('bhnp,bhdp->bhnd', km, QS0)
    ats0 = jnp.exp(prod) * rs0[:, None, None, None] * mf
    dinv = 1.0 / ats0.sum(-2)                                        # (B,H,NBF)
    da = dinv[:, :, None, :] * ats0
    prob = jnp.sqrt((da * da).sum(-1) * (vm * vm).sum(-1))           # (B,H,N)

    m_tot = accumulation * nb_features
    gidx = S1.reshape(b, h, m_tot)[..., None]
    K1 = jnp.take_along_axis(km, gidx, axis=2)                       # (B,H,M,P)
    S1TV = jnp.take_along_axis(vm, gidx, axis=2)                     # (B,H,M,P)
    qK1 = jnp.einsum('bhnp,bhmp->bhnm', qm, K1)                      # (B,H,N,M)
    AS1 = jnp.exp(qK1)
    AV1 = jnp.einsum('bhnm,bhmp->bhnp', AS1, S1TV)
    A1_sum = AS1.sum(-1)                                             # (B,H,N)
    model_column = jnp.exp(qK1.mean(-1))                             # (B,H,N)
    V_sum = model_column[..., None] * vm.sum(-2)[:, :, None, :]
    V1_sum = model_column[..., None] * S1TV.sum(-2)[:, :, None, :]
    D1 = A1_sum + model_column * (non_padding - nb_features)[:, None, None]
    out = (AV1 + V_sum - V1_sum) / D1[..., None]
    return prob, out


if __name__ == "__main__":
    B, H, N, P = 2, 2, 128, 32
    NB_FEATURES_CFG = 16       # config['nb_features']
    ACCUMULATION = 4           # config['accumulation']

    root = jax.random.PRNGKey(0)
    kq, kk, kv, ks = jax.random.split(root, 4)
    q = jax.random.normal(kq, (B, H, N, P), jnp.float32)
    k = jax.random.normal(kk, (B, H, N, P), jnp.float32)
    v = jax.random.normal(kv, (B, H, N, P), jnp.float32)
    mask = jnp.ones((B, N), jnp.float32).at[1, 120:].set(0.0)   # batch 1 has 8 padded tokens

    # nb_features clamp done host-side on the concrete mask (same .item() clamp as the module)
    min_non_padding = int(jnp.min(jnp.sum(mask, axis=-1)))
    nb_features = min(NB_FEATURES_CFG, min_non_padding - 1)

    out, aux = skein_forward(q, k, v, mask, ks, nb_features, ACCUMULATION)
    out = jax.block_until_ready(out)

    prob_ref, out_ref = reference(q, k, v, mask, aux["S0b"], aux["rs0"],
                                  aux["S1"], nb_features, ACCUMULATION)
    assert out.shape == (B, H, N, P)
    assert bool(jnp.all(jnp.isfinite(out)))
    # Tolerances reflect bf16 MXU operands (f32 accumulation); reciprocals are exact.
    assert bool(jnp.allclose(aux["prob"], prob_ref, rtol=2e-2, atol=1e-3)), "prob mismatch"
    assert bool(jnp.allclose(out, out_ref, rtol=2e-2, atol=1e-2)), "output mismatch"
    print("KERNEL_OK")
</pallas_src>

<mosaic_0001>
module attributes {stable_mosaic.version = 11 : i64} {
  func.func @_sketch_kernel(%arg0: i32, %arg1: i32, %arg2: memref<1x1x128x32xf32, #tpu.memory_space<vmem>>, %arg3: memref<1x1x128x32xf32, #tpu.memory_space<vmem>>, %arg4: memref<1x1x16x32xf32, #tpu.memory_space<vmem>>, %arg5: memref<1x128x1xf32, #tpu.memory_space<vmem>>, %arg6: memref<1x1x128xf32, #tpu.memory_space<vmem>>, %arg7: memref<1x1x1x128xf32, #tpu.memory_space<vmem>>, %arg8: memref<1x1x32x1xf32, #tpu.memory_space<vmem>>) attributes {dimension_semantics = [#tpu.dimension_semantics<parallel>, #tpu.dimension_semantics<parallel>], iteration_bounds = array<i64: 2, 2>, scalar_prefetch = 0 : i64, scratch_operands = 0 : i64, tpu.core_type = #tpu.core_type<tc>, window_params = [{transform_indices = @transform_0, window_bounds = array<i64: 1, 1, 128, 32>}, {transform_indices = @transform_1, window_bounds = array<i64: 1, 1, 128, 32>}, {transform_indices = @transform_2, window_bounds = array<i64: 1, 1, 16, 32>}, {transform_indices = @transform_3, window_bounds = array<i64: 1, 128, 1>}, {transform_indices = @transform_4, window_bounds = array<i64: 1, 1, 128>}, {transform_indices = @transform_5, window_bounds = array<i64: 1, 1, 1, 128>}, {transform_indices = @transform_6, window_bounds = array<i64: 1, 1, 32, 1>}]} {
    %c0 = arith.constant 0 : index
    %c0_0 = arith.constant 0 : index
    %c0_1 = arith.constant 0 : index
    %c0_2 = arith.constant 0 : index
    %0 = vector.load %arg2[%c0, %c0_0, %c0_1, %c0_2] : memref<1x1x128x32xf32, #tpu.memory_space<vmem>>, vector<1x1x128x32xf32>
    %1 = vector.shape_cast %0 : vector<1x1x128x32xf32> to vector<1x128x32xf32>
    %2 = arith.truncf %1 : vector<1x128x32xf32> to vector<1x128x32xbf16>
    %c0_3 = arith.constant 0 : index
    %c0_4 = arith.constant 0 : index
    %c0_5 = arith.constant 0 : index
    %c0_6 = arith.constant 0 : index
    %3 = vector.load %arg4[%c0_3, %c0_4, %c0_5, %c0_6] : memref<1x1x16x32xf32, #tpu.memory_space<vmem>>, vector<1x1x16x32xf32>
    %4 = vector.shape_cast %3 : vector<1x1x16x32xf32> to vector<1x16x32xf32>
    %5 = arith.truncf %4 : vector<1x16x32xf32> to vector<1x16x32xbf16>
    "tpu.trace_start"() <{level = 10 : i32, message = "hdp,hnp->hdn"}> : () -> ()
    %cst = arith.constant dense<0.000000e+00> : vector<1x16x128xf32>
    %6 = tpu.matmul %5, %2, %cst {dimension_numbers = #tpu.dot_dimension_numbers<[2], [2], [1], [1], [0, 0, 0, 1, 1, 1], [0], [0]>} : vector<1x16x32xbf16>, vector<1x128x32xbf16>, vector<1x16x128xf32> -> vector<1x16x128xf32>
    "tpu.trace_stop"() : () -> ()
    %7 = math.exp %6 : vector<1x16x128xf32>
    %c0_7 = arith.constant 0 : index
    %c0_8 = arith.constant 0 : index
    %c0_9 = arith.constant 0 : index
    %8 = vector.load %arg6[%c0_7, %c0_8, %c0_9] : memref<1x1x128xf32, #tpu.memory_space<vmem>>, vector<1x1x128xf32>
    %9 = vector.shape_cast %8 : vector<1x1x128xf32> to vector<1x128xf32>
    %10 = vector.shape_cast %9 : vector<1x128xf32> to vector<1x1x128xf32>
    %11 = vector.broadcast %10 : vector<1x1x128xf32> to vector<1x16x128xf32>
    %12 = arith.mulf %7, %11 : vector<1x16x128xf32>
    %cst_10 = arith.constant dense<0.000000e+00> : vector<1x16xf32>
    %13 = vector.multi_reduction <add>, %12, %cst_10 [2] : vector<1x16x128xf32> to vector<1x16xf32>
    %14 = vector.shape_cast %13 : vector<1x16xf32> to vector<1x16x1xf32>
    %cst_11 = arith.constant 1.000000e+00 : f32
    %15 = vector.broadcast %cst_11 : f32 to vector<1x16x1xf32>
    %16 = arith.divf %15, %14 : vector<1x16x1xf32>
    %17 = vector.broadcast %16 : vector<1x16x1xf32> to vector<1x16x128xf32>
    %18 = arith.mulf %17, %12 : vector<1x16x128xf32>
    %19 = arith.mulf %18, %18 : vector<1x16x128xf32>
    %cst_12 = arith.constant dense<0.000000e+00> : vector<1x128xf32>
    %20 = vector.multi_reduction <add>, %19, %cst_12 [1] : vector<1x16x128xf32> to vector<1x128xf32>
    %c0_13 = arith.constant 0 : index
    %c0_14 = arith.constant 0 : index
    %c0_15 = arith.constant 0 : index
    %c0_16 = arith.constant 0 : index
    %21 = vector.load %arg3[%c0_13, %c0_14, %c0_15, %c0_16] : memref<1x1x128x32xf32, #tpu.memory_space<vmem>>, vector<1x1x128x32xf32>
    %22 = vector.shape_cast %21 : vector<1x1x128x32xf32> to vector<1x128x32xf32>
    %c0_17 = arith.constant 0 : index
    %c0_18 = arith.constant 0 : index
    %c0_19 = arith.constant 0 : index
    %23 = vector.load %arg5[%c0_17, %c0_18, %c0_19] : memref<1x128x1xf32, #tpu.memory_space<vmem>>, vector<1x128x1xf32>
    %24 = vector.shape_cast %23 : vector<1x128x1xf32> to vector<128x1xf32>
    %25 = vector.shape_cast %24 : vector<128x1xf32> to vector<1x128x1xf32>
    %26 = vector.broadcast %25 : vector<1x128x1xf32> to vector<1x128x32xf32>
    %27 = arith.mulf %22, %26 : vector<1x128x32xf32>
    %28 = arith.mulf %27, %27 : vector<1x128x32xf32>
    %cst_20 = arith.constant dense<0.000000e+00> : vector<1x128xf32>
    %29 = vector.multi_reduction <add>, %28, %cst_20 [2] : vector<1x128x32xf32> to vector<1x128xf32>
    %30 = arith.mulf %20, %29 : vector<1x128xf32>
    %31 = math.sqrt %30 : vector<1x128xf32>
    %32 = vector.shape_cast %31 : vector<1x128xf32> to vector<1x1x128xf32>
    %c0_21 = arith.constant 0 : index
    %c0_22 = arith.constant 0 : index
    %c0_23 = arith.constant 0 : index
    %c0_24 = arith.constant 0 : index
    %33 = vector.load %arg7[%c0_21, %c0_22, %c0_23, %c0_24] : memref<1x1x1x128xf32, #tpu.memory_space<vmem>>, vector<1x1x1x128xf32>
    %34 = vector.shape_cast %33 : vector<1x1x1x128xf32> to vector<1x1x128xf32>
    %35 = vector.shape_cast %32 : vector<1x1x128xf32> to vector<1x1x1x128xf32>
    tpu.vector_store %arg7[%c0_21, %c0_22, %c0_23, %c0_24], %35 {strides = array<i32>} : memref<1x1x1x128xf32, #tpu.memory_space<vmem>>, vector<1x1x1x128xf32>,
    %cst_25 = arith.constant dense<0.000000e+00> : vector<1x32xf32>
    %36 = vector.multi_reduction <add>, %27, %cst_25 [1] : vector<1x128x32xf32> to vector<1x32xf32>
    %37 = vector.shape_cast %36 : vector<1x32xf32> to vector<1x32x1xf32>
    %c0_26 = arith.constant 0 : index
    %c0_27 = arith.constant 0 : index
    %c0_28 = arith.constant 0 : index
    %c0_29 = arith.constant 0 : index
    %38 = vector.load %arg8[%c0_26, %c0_27, %c0_28, %c0_29] : memref<1x1x32x1xf32, #tpu.memory_space<vmem>>, vector<1x1x32x1xf32>
    %39 = vector.shape_cast %38 : vector<1x1x32x1xf32> to vector<1x32x1xf32>
    %40 = vector.shape_cast %37 : vector<1x32x1xf32> to vector<1x1x32x1xf32>
    tpu.vector_store %arg8[%c0_26, %c0_27, %c0_28, %c0_29], %40 {strides = array<i32>} : memref<1x1x32x1xf32, #tpu.memory_space<vmem>>, vector<1x1x32x1xf32>,
    return
  }
  func.func @transform_0(%arg0: i32, %arg1: i32) -> (i32, i32, i32, i32) {
    %c0_i32 = arith.constant 0 : i32
    %c0_i32_0 = arith.constant 0 : i32
    %c0_i32_1 = arith.constant 0 : i32
    return %arg0, %arg1, %c0_i32, %c0_i32_0 : i32, i32, i32, i32
  }
  func.func @transform_1(%arg0: i32, %arg1: i32) -> (i32, i32, i32, i32) {
    %c0_i32 = arith.constant 0 : i32
    %c0_i32_0 = arith.constant 0 : i32
    %c0_i32_1 = arith.constant 0 : i32
    return %arg0, %arg1, %c0_i32, %c0_i32_0 : i32, i32, i32, i32
  }
  func.func @transform_2(%arg0: i32, %arg1: i32) -> (i32, i32, i32, i32) {
    %c0_i32 = arith.constant 0 : i32
    %c0_i32_0 = arith.constant 0 : i32
    %c0_i32_1 = arith.constant 0 : i32
    return %arg0, %arg1, %c0_i32, %c0_i32_0 : i32, i32, i32, i32
  }
  func.func @transform_3(%arg0: i32, %arg1: i32) -> (i32, i32, i32) {
    %c0_i32 = arith.constant 0 : i32
    %c0_i32_0 = arith.constant 0 : i32
    %c0_i32_1 = arith.constant 0 : i32
    return %arg0, %c0_i32, %c0_i32_0 : i32, i32, i32
  }
  func.func @transform_4(%arg0: i32, %arg1: i32) -> (i32, i32, i32) {
    %c0_i32 = arith.constant 0 : i32
    %c0_i32_0 = arith.constant 0 : i32
    %c0_i32_1 = arith.constant 0 : i32
    return %arg0, %c0_i32, %c0_i32_0 : i32, i32, i32
  }
  func.func @transform_5(%arg0: i32, %arg1: i32) -> (i32, i32, i32, i32) {
    %c0_i32 = arith.constant 0 : i32
    %c0_i32_0 = arith.constant 0 : i32
    %c0_i32_1 = arith.constant 0 : i32
    return %arg0, %arg1, %c0_i32, %c0_i32_0 : i32, i32, i32, i32
  }
  func.func @transform_6(%arg0: i32, %arg1: i32) -> (i32, i32, i32, i32) {
    %c0_i32 = arith.constant 0 : i32
    %c0_i32_0 = arith.constant 0 : i32
    %c0_i32_1 = arith.constant 0 : i32
    return %arg0, %arg1, %c0_i32, %c0_i32_0 : i32, i32, i32, i32
  }
}

module attributes {stable_mosaic.version = 11 : i64} {
  func.func @_attn_kernel(%arg0: i32, %arg1: i32, %arg2: memref<1x2x128x32xf32, #tpu.memory_space<vmem>>, %arg3: memref<1x1x128xf32, #tpu.memory_space<vmem>>, %arg4: memref<1x2x64x32xf32, #tpu.memory_space<vmem>>, %arg5: memref<1x2x64x32xf32, #tpu.memory_space<vmem>>, %arg6: memref<1x2x32x1xf32, #tpu.memory_space<vmem>>, %arg7: memref<2xf32, #tpu.memory_space<smem>>, %arg8: memref<1x2x32x128xf32, #tpu.memory_space<vmem>>) attributes {dimension_semantics = [#tpu.dimension_semantics<parallel>, #tpu.dimension_semantics<parallel>], iteration_bounds = array<i64: 2, 1>, scalar_prefetch = 0 : i64, scratch_operands = 0 : i64, tpu.core_type = #tpu.core_type<tc>, window_params = [{transform_indices = @transform_0, window_bounds = array<i64: 1, 2, 128, 32>}, {transform_indices = @transform_1, window_bounds = array<i64: 1, 1, 128>}, {transform_indices = @transform_2, window_bounds = array<i64: 1, 2, 64, 32>}, {transform_indices = @transform_3, window_bounds = array<i64: 1, 2, 64, 32>}, {transform_indices = @transform_4, window_bounds = array<i64: 1, 2, 32, 1>}, {transform_indices = @transform_5, window_bounds = array<i64: 2>}, {transform_indices = @transform_6, window_bounds = array<i64: 1, 2, 32, 128>}]} {
    %0 = arith.index_cast %arg0 : i32 to index
    %1 = memref.load %arg7[%0] : memref<2xf32, #tpu.memory_space<smem>>
    %c0 = arith.constant 0 : index
    %c0_0 = arith.constant 0 : index
    %c0_1 = arith.constant 0 : index
    %c0_2 = arith.constant 0 : index
    %2 = vector.load %arg2[%c0, %c0_0, %c0_1, %c0_2] : memref<1x2x128x32xf32, #tpu.memory_space<vmem>>, vector<1x2x128x32xf32>
    %3 = vector.shape_cast %2 : vector<1x2x128x32xf32> to vector<2x128x32xf32>
    %4 = arith.truncf %3 : vector<2x128x32xf32> to vector<2x128x32xbf16>
    %c0_3 = arith.constant 0 : index
    %c0_4 = arith.constant 0 : index
    %c0_5 = arith.constant 0 : index
    %c0_6 = arith.constant 0 : index
    %5 = vector.load %arg4[%c0_3, %c0_4, %c0_5, %c0_6] : memref<1x2x64x32xf32, #tpu.memory_space<vmem>>, vector<1x2x64x32xf32>
    %6 = vector.shape_cast %5 : vector<1x2x64x32xf32> to vector<2x64x32xf32>
    %7 = arith.truncf %6 : vector<2x64x32xf32> to vector<2x64x32xbf16>
    %c0_7 = arith.constant 0 : index
    %c0_8 = arith.constant 0 : index
    %c0_9 = arith.constant 0 : index
    %c0_10 = arith.constant 0 : index
    %8 = vector.load %arg5[%c0_7, %c0_8, %c0_9, %c0_10] : memref<1x2x64x32xf32, #tpu.memory_space<vmem>>, vector<1x2x64x32xf32>
    %9 = vector.shape_cast %8 : vector<1x2x64x32xf32> to vector<2x64x32xf32>
    "tpu.trace_start"() <{level = 10 : i32, message = "hmp,hnp->hmn"}> : () -> ()
    %cst = arith.constant dense<0.000000e+00> : vector<2x64x128xf32>
    %10 = tpu.matmul %7, %4, %cst {dimension_numbers = #tpu.dot_dimension_numbers<[2], [2], [1], [1], [0, 0, 0, 1, 1, 1], [0], [0]>} : vector<2x64x32xbf16>, vector<2x128x32xbf16>, vector<2x64x128xf32> -> vector<2x64x128xf32>
    "tpu.trace_stop"() : () -> ()
    %c0_11 = arith.constant 0 : index
    %c0_12 = arith.constant 0 : index
    %c0_13 = arith.constant 0 : index
    %11 = vector.load %arg3[%c0_11, %c0_12, %c0_13] : memref<1x1x128xf32, #tpu.memory_space<vmem>>, vector<1x1x128xf32>
    %12 = vector.shape_cast %11 : vector<1x1x128xf32> to vector<1x128xf32>
    %13 = vector.shape_cast %12 : vector<1x128xf32> to vector<1x1x128xf32>
    %14 = vector.broadcast %13 : vector<1x1x128xf32> to vector<2x64x128xf32>
    %15 = arith.mulf %10, %14 : vector<2x64x128xf32>
    %16 = math.exp %15 : vector<2x64x128xf32>
    %cst_14 = arith.constant dense<0.000000e+00> : vector<2x128xf32>
    %17 = vector.multi_reduction <add>, %16, %cst_14 [1] : vector<2x64x128xf32> to vector<2x128xf32>
    %18 = vector.shape_cast %17 : vector<2x128xf32> to vector<2x1x128xf32>
    %cst_15 = arith.constant dense<0.000000e+00> : vector<2x128xf32>
    %19 = vector.multi_reduction <add>, %15, %cst_15 [1] : vector<2x64x128xf32> to vector<2x128xf32>
    %20 = vector.shape_cast %19 : vector<2x128xf32> to vector<2x1x128xf32>
    %cst_16 = arith.constant 1.562500e-02 : f32
    %21 = vector.broadcast %cst_16 : f32 to vector<2x1x128xf32>
    %22 = arith.mulf %20, %21 : vector<2x1x128xf32>
    %23 = math.exp %22 : vector<2x1x128xf32>
    %24 = arith.truncf %16 : vector<2x64x128xf32> to vector<2x64x128xbf16>
    %25 = arith.truncf %9 : vector<2x64x32xf32> to vector<2x64x32xbf16>
    "tpu.trace_start"() <{level = 10 : i32, message = "hmn,hmp->hpn"}> : () -> ()
    %cst_17 = arith.constant dense<0.000000e+00> : vector<2x32x128xf32>
    %26 = tpu.matmul %25, %24, %cst_17 {dimension_numbers = #tpu.dot_dimension_numbers<[1], [1], [2], [2], [0, 0, 0, 2, 1, 2], [0], [0]>} : vector<2x64x32xbf16>, vector<2x64x128xbf16>, vector<2x32x128xf32> -> vector<2x32x128xf32>
    "tpu.trace_stop"() : () -> ()
    %cst_18 = arith.constant dense<0.000000e+00> : vector<2x32xf32>
    %27 = vector.multi_reduction <add>, %9, %cst_18 [1] : vector<2x64x32xf32> to vector<2x32xf32>
    %28 = vector.shape_cast %27 : vector<2x32xf32> to vector<2x32x1xf32>
    %c0_19 = arith.constant 0 : index
    %c0_20 = arith.constant 0 : index
    %c0_21 = arith.constant 0 : index
    %c0_22 = arith.constant 0 : index
    %29 = vector.load %arg6[%c0_19, %c0_20, %c0_21, %c0_22] : memref<1x2x32x1xf32, #tpu.memory_space<vmem>>, vector<1x2x32x1xf32>
    %30 = vector.shape_cast %29 : vector<1x2x32x1xf32> to vector<2x32x1xf32>
    %31 = arith.subf %30, %28 : vector<2x32x1xf32>
    %32 = vector.broadcast %23 : vector<2x1x128xf32> to vector<2x32x128xf32>
    %33 = vector.broadcast %31 : vector<2x32x1xf32> to vector<2x32x128xf32>
    %34 = arith.mulf %32, %33 : vector<2x32x128xf32>
    %35 = arith.addf %26, %34 : vector<2x32x128xf32>
    %36 = vector.broadcast %1 : f32 to vector<2x1x128xf32>
    %37 = arith.mulf %23, %36 : vector<2x1x128xf32>
    %38 = arith.addf %18, %37 : vector<2x1x128xf32>
    %cst_23 = arith.constant 1.000000e+00 : f32
    %39 = vector.broadcast %cst_23 : f32 to vector<2x1x128xf32>
    %40 = arith.divf %39, %38 : vector<2x1x128xf32>
    %41 = vector.broadcast %40 : vector<2x1x128xf32> to vector<2x32x128xf32>
    %42 = arith.mulf %35, %41 : vector<2x32x128xf32>
    %c0_24 = arith.constant 0 : index
    %c0_25 = arith.constant 0 : index
    %c0_26 = arith.constant 0 : index
    %c0_27 = arith.constant 0 : index
    %43 = vector.load %arg8[%c0_24, %c0_25, %c0_26, %c0_27] : memref<1x2x32x128xf32, #tpu.memory_space<vmem>>, vector<1x2x32x128xf32>
    %44 = vector.shape_cast %43 : vector<1x2x32x128xf32> to vector<2x32x128xf32>
    %45 = vector.shape_cast %42 : vector<2x32x128xf32> to vector<1x2x32x128xf32>
    tpu.vector_store %arg8[%c0_24, %c0_25, %c0_26, %c0_27], %45 {strides = array<i32>} : memref<1x2x32x128xf32, #tpu.memory_space<vmem>>, vector<1x2x32x128xf32>,
    return
  }
  func.func @transform_0(%arg0: i32, %arg1: i32) -> (i32, i32, i32, i32) {
    %c0_i32 = arith.constant 0 : i32
    %c0_i32_0 = arith.constant 0 : i32
    %c0_i32_1 = arith.constant 0 : i32
    return %arg0, %c0_i32, %arg1, %c0_i32_0 : i32, i32, i32, i32
  }
  func.func @transform_1(%arg0: i32, %arg1: i32) -> (i32, i32, i32) {
    %c0_i32 = arith.constant 0 : i32
    %c0_i32_0 = arith.constant 0 : i32
    return %arg0, %c0_i32, %arg1 : i32, i32, i32
  }
  func.func @transform_2(%arg0: i32, %arg1: i32) -> (i32, i32, i32, i32) {
    %c0_i32 = arith.constant 0 : i32
    %c0_i32_0 = arith.constant 0 : i32
    %c0_i32_1 = arith.constant 0 : i32
    %c0_i32_2 = arith.constant 0 : i32
    return %arg0, %c0_i32, %c0_i32_0, %c0_i32_1 : i32, i32, i32, i32
  }
  func.func @transform_3(%arg0: i32, %arg1: i32) -> (i32, i32, i32, i32) {
    %c0_i32 = arith.constant 0 : i32
    %c0_i32_0 = arith.constant 0 : i32
    %c0_i32_1 = arith.constant 0 : i32
    %c0_i32_2 = arith.constant 0 : i32
    return %arg0, %c0_i32, %c0_i32_0, %c0_i32_1 : i32, i32, i32, i32
  }
  func.func @transform_4(%arg0: i32, %arg1: i32) -> (i32, i32, i32, i32) {
    %c0_i32 = arith.constant 0 : i32
    %c0_i32_0 = arith.constant 0 : i32
    %c0_i32_1 = arith.constant 0 : i32
    %c0_i32_2 = arith.constant 0 : i32
    return %arg0, %c0_i32, %c0_i32_0, %c0_i32_1 : i32, i32, i32, i32
  }
  func.func @transform_5(%arg0: i32, %arg1: i32) -> i32 {
    %c0_i32 = arith.constant 0 : i32
    %c0_i32_0 = arith.constant 0 : i32
    return %c0_i32 : i32
  }
  func.func @transform_6(%arg0: i32, %arg1: i32) -> (i32, i32, i32, i32) {
    %c0_i32 = arith.constant 0 : i32
    %c0_i32_0 = arith.constant 0 : i32
    %c0_i32_1 = arith.constant 0 : i32
    return %arg0, %c0_i32, %c0_i32_0, %arg1 : i32, i32, i32, i32
  }
}

</mosaic_0001>

<llo_original>
// kernel: skein_forward.4
$region0: #{skein_forward.4}
  #allocation0 [shape = 'u32[]', space=smem, size = 0x4, offset = 0x4, fixed_abs, tag = 'smem constant byte address 0x4 - core index']
  #allocation1 [shape = 'u32[144,128]{1,0:T(1,128)}', space=vmem, size = 0x12000, scoped, tag = 'internal scratch']
  %s0 = inlined_call_operand.vmem [shape: f32[2,2,128,32], index: 0, kind: input, shape index: {}]
  %s1 = inlined_call_operand.vmem [shape: f32[2,2,128,32], index: 1, kind: input, shape index: {}]
  %s2 = inlined_call_operand.vmem [shape: f32[2,2,16,32], index: 2, kind: input, shape index: {}]
  %s3 = inlined_call_operand.vmem [shape: f32[2,128,1], index: 3, kind: input, shape index: {}]
  %s4 = inlined_call_operand.vmem [shape: f32[2,1,128], index: 4, kind: input, shape index: {}]
  %s5 = inlined_call_operand.vmem [shape: f32[2,2,1,128], index: 5, kind: output, shape index: {0}]
  %s6 = inlined_call_operand.vmem [shape: f32[2,2,32,1], index: 6, kind: output, shape index: {1}]
  %7 = xla_tuple %s5, %s6
  %s8 = sld [smem:[#allocation0]]
  $region61: #{skein_forward.4} parent=0
    _
  %s10 = ssub.s32 1, %s8
  %s11 = scalar_select 0, %s10, %s8
  loop: start=0, step=1, limit=6
  $region2: #{skein_forward.4} parent=0 // loop_pre_header
    _
  $region3: #{skein_forward.4} parent=0 // loop_header
    %s13 = sphi 0, %s17
    %p14 = scmp.ge.s32.totalorder %s13, 6
    %s20 = sphi 0, %s32
    %s21 = sphi 0, %s28
    %s22 = sphi 0, %s20
    %s23 = sphi 0, %s21
    %s24 = sphi 0, %s22
    %s25 = sphi 0, %s23
    %s37 = sphi 0, %s39
    %s40 = sphi 0, %s37
    %s41 = sphi 0, %s40
    %s57 = sphi 0, %s41
    %s65 = sphi 0, %s67
    %s68 = sphi 0, %s65
    %s69 = sphi 0, %s68
    %s85 = sphi 0, %s69
    %s93 = sphi 0, %s95
    %s96 = sphi 0, %s93
    %s97 = sphi 0, %s96
    %s113 = sphi 0, %s97
    %s119 = sphi 0, %s121
    %s122 = sphi 0, %s119
    %s123 = sphi 0, %s122
    %s139 = sphi 0, %s123
    %s145 = sphi 0, %s147
    %s148 = sphi 0, %s145
    %s149 = sphi 0, %s148
    %s165 = sphi 0, %s149
    %s173 = sphi 0, %s175
    %s176 = sphi 0, %s173
    %s177 = sphi 0, %s176
    %s193 = sphi 0, %s177
    %s201 = sphi 0, %s203
    %s204 = sphi 0, %s201
    %s205 = sphi 0, %s204
    %s221 = sphi 0, %s205
  $region4: #{skein_forward.4} parent=0 // loop_header_branch
    %16 = sbr.rel (%p14) target = $region8
  $region5: #{skein_forward.4} parent=0 // loop_body
    %s18 = ssub.s32 %s13, 1
    %s19 = ssub.s32 %s13, 2
    %s26 = sadd.s32 1, %s21
    %p27 = scmp.ge.s32.totalorder %s26, 2
    %s28 = scalar_select %p27, 0, %s26
    %s29 = sadd.s32 1, %s20
    %s30 = scalar_select %p27, %s29, %s20
    %p31 = scmp.ge.s32.totalorder %s30, 2
    %s32 = scalar_select %p31, 0, %s30
    %s33 = ssub.s32 %s20, %s32
    %s34 = ssub.s32 %s21, %s28
    %s35 = sor.u32 %s33, %s34
    %p36 = scmp.eq.s32.totalorder %s35, 0
    %s38 = sadd.s32 %s37, 1
    %s39 = scalar_select %p36, %s37, %s38
    %p42 = pneg %p36
    %p43 = scmp.eq.s32.totalorder %s13, 3
    %p44 = por %p42, %p43
    %p45 = scmp.ne.s32.totalorder %s37, %s40
    %p46 = scmp.eq.s32.totalorder %s13, 0
    %p47 = por %p45, %p46
    %p48 = scmp.ne.s32.totalorder %s37, %s40
    %p49 = scmp.eq.s32.totalorder %s18, 3
    %p50 = por %p48, %p49
    %p51 = scmp.ne.s32.totalorder %s40, %s41
    %p52 = scmp.eq.s32.totalorder %s18, 0
    %p53 = por %p51, %p52
    %p54 = scmp.ne.s32.totalorder %s40, %s41
    %p55 = scmp.eq.s32.totalorder %s19, 3
    %p56 = por %p54, %p55
    %p58 = scmp.ne.s32.totalorder %s41, %s57
    %p59 = scmp.eq.s32.totalorder %s19, 0
    %p60 = por %p58, %p59
    %s61 = ssub.s32 %s20, %s32
    %s62 = ssub.s32 %s21, %s28
    %s63 = sor.u32 %s61, %s62
    %p64 = scmp.eq.s32.totalorder %s63, 0
    %s66 = sadd.s32 %s65, 1
    %s67 = scalar_select %p64, %s65, %s66
    %p70 = pneg %p64
    %p71 = scmp.eq.s32.totalorder %s13, 3
    %p72 = por %p70, %p71
    %p73 = scmp.ne.s32.totalorder %s65, %s68
    %p74 = scmp.eq.s32.totalorder %s13, 0
    %p75 = por %p73, %p74
    %p76 = scmp.ne.s32.totalorder %s65, %s68
    %p77 = scmp.eq.s32.totalorder %s18, 3
    %p78 = por %p76, %p77
    %p79 = scmp.ne.s32.totalorder %s68, %s69
    %p80 = scmp.eq.s32.totalorder %s18, 0
    %p81 = por %p79, %p80
    %p82 = scmp.ne.s32.totalorder %s68, %s69
    %p83 = scmp.eq.s32.totalorder %s19, 3
    %p84 = por %p82, %p83
    %p86 = scmp.ne.s32.totalorder %s69, %s85
    %p87 = scmp.eq.s32.totalorder %s19, 0
    %p88 = por %p86, %p87
    %s89 = ssub.s32 %s20, %s32
    %s90 = ssub.s32 %s21, %s28
    %s91 = sor.u32 %s89, %s90
    %p92 = scmp.eq.s32.totalorder %s91, 0
    %s94 = sadd.s32 %s93, 1
    %s95 = scalar_select %p92, %s93, %s94
    %p98 = pneg %p92
    %p99 = scmp.eq.s32.totalorder %s13, 3
    %p100 = por %p98, %p99
    %p101 = scmp.ne.s32.totalorder %s93, %s96
    %p102 = scmp.eq.s32.totalorder %s13, 0
    %p103 = por %p101, %p102
    %p104 = scmp.ne.s32.totalorder %s93, %s96
    %p105 = scmp.eq.s32.totalorder %s18, 3
    %p106 = por %p104, %p105
    %p107 = scmp.ne.s32.totalorder %s96, %s97
    %p108 = scmp.eq.s32.totalorder %s18, 0
    %p109 = por %p107, %p108
    %p110 = scmp.ne.s32.totalorder %s96, %s97
    %p111 = scmp.eq.s32.totalorder %s19, 3
    %p112 = por %p110, %p111
    %p114 = scmp.ne.s32.totalorder %s97, %s113
    %p115 = scmp.eq.s32.totalorder %s19, 0
    %p116 = por %p114, %p115
    %s117 = ssub.s32 %s20, %s32
    %p118 = scmp.eq.s32.totalorder %s117, 0
    %s120 = sadd.s32 %s119, 1
    %s121 = scalar_select %p118, %s119, %s120
    %p124 = pneg %p118
    %p125 = scmp.eq.s32.totalorder %s13, 3
    %p126 = por %p124, %p125
    %p127 = scmp.ne.s32.totalorder %s119, %s122
    %p128 = scmp.eq.s32.totalorder %s13, 0
    %p129 = por %p127, %p128
    %p130 = scmp.ne.s32.totalorder %s119, %s122
    %p131 = scmp.eq.s32.totalorder %s18, 3
    %p132 = por %p130, %p131
    %p133 = scmp.ne.s32.totalorder %s122, %s123
    %p134 = scmp.eq.s32.totalorder %s18, 0
    %p135 = por %p133, %p134
    %p136 = scmp.ne.s32.totalorder %s122, %s123
    %p137 = scmp.eq.s32.totalorder %s19, 3
    %p138 = por %p136, %p137
    %p140 = scmp.ne.s32.totalorder %s123, %s139
    %p141 = scmp.eq.s32.totalorder %s19, 0
    %p142 = por %p140, %p141
    %s143 = ssub.s32 %s20, %s32
    %p144 = scmp.eq.s32.totalorder %s143, 0
    %s146 = sadd.s32 %s145, 1
    %s147 = scalar_select %p144, %s145, %s146
    %p150 = pneg %p144
    %p151 = scmp.eq.s32.totalorder %s13, 3
    %p152 = por %p150, %p151
    %p153 = scmp.ne.s32.totalorder %s145, %s148
    %p154 = scmp.eq.s32.totalorder %s13, 0
    %p155 = por %p153, %p154
    %p156 = scmp.ne.s32.totalorder %s145, %s148
    %p157 = scmp.eq.s32.totalorder %s18, 3
    %p158 = por %p156, %p157
    %p159 = scmp.ne.s32.totalorder %s148, %s149
    %p160 = scmp.eq.s32.totalorder %s18, 0
    %p161 = por %p159, %p160
    %p162 = scmp.ne.s32.totalorder %s148, %s149
    %p163 = scmp.eq.s32.totalorder %s19, 3
    %p164 = por %p162, %p163
    %p166 = scmp.ne.s32.totalorder %s149, %s165
    %p167 = scmp.eq.s32.totalorder %s19, 0
    %p168 = por %p166, %p167
    %s169 = ssub.s32 %s20, %s32
    %s170 = ssub.s32 %s21, %s28
    %s171 = sor.u32 %s169, %s170
    %p172 = scmp.eq.s32.totalorder %s171, 0
    %s174 = sadd.s32 %s173, 1
    %s175 = scalar_select %p172, %s173, %s174
    %p178 = pneg %p172
    %p179 = scmp.eq.s32.totalorder %s13, 3
    %p180 = por %p178, %p179
    %p181 = scmp.ne.s32.totalorder %s173, %s176
    %p182 = scmp.eq.s32.totalorder %s13, 0
    %p183 = por %p181, %p182
    %p184 = scmp.ne.s32.totalorder %s173, %s176
    %p185 = scmp.eq.s32.totalorder %s18, 3
    %p186 = por %p184, %p185
    %p187 = scmp.ne.s32.totalorder %s176, %s177
    %p188 = scmp.eq.s32.totalorder %s18, 0
    %p189 = por %p187, %p188
    %p190 = scmp.ne.s32.totalorder %s176, %s177
    %p191 = scmp.eq.s32.totalorder %s19, 3
    %p192 = por %p190, %p191
    %p194 = scmp.ne.s32.totalorder %s177, %s193
    %p195 = scmp.eq.s32.totalorder %s19, 0
    %p196 = por %p194, %p195
    %s197 = ssub.s32 %s20, %s32
    %s198 = ssub.s32 %s21, %s28
    %s199 = sor.u32 %s197, %s198
    %p200 = scmp.eq.s32.totalorder %s199, 0
    %s202 = sadd.s32 %s201, 1
    %s203 = scalar_select %p200, %s201, %s202
    %p206 = pneg %p200
    %p207 = scmp.eq.s32.totalorder %s13, 3
    %p208 = por %p206, %p207
    %p209 = scmp.ne.s32.totalorder %s201, %s204
    %p210 = scmp.eq.s32.totalorder %s13, 0
    %p211 = por %p209, %p210
    %p212 = scmp.ne.s32.totalorder %s201, %s204
    %p213 = scmp.eq.s32.totalorder %s18, 3
    %p214 = por %p212, %p213
    %p215 = scmp.ne.s32.totalorder %s204, %s205
    %p216 = scmp.eq.s32.totalorder %s18, 0
    %p217 = por %p215, %p216
    %p218 = scmp.ne.s32.totalorder %s204, %s205
    %p219 = scmp.eq.s32.totalorder %s19, 3
    %p220 = por %p218, %p219
    %p222 = scmp.ne.s32.totalorder %s205, %s221
    %p223 = scmp.eq.s32.totalorder %s19, 0
    %p224 = por %p222, %p223
    %p225 = scmp.le.s32.totalorder 1, %s13
    %p226 = scmp.lt.s32.totalorder %s13, 5
    %p227 = pnand %p225, %p226
    %p228 = pneg %p227
    // Predicated region
    $region9: #{skein_forward.4} parent=5 // pred_check
      _
    $region10: #{skein_forward.4} parent=5 // pred_check_branch
      %230 = sbr.rel (%p227) target = $region12
    $region11: #{skein_forward.4} parent=5 // pred_region
      %s231 = ssub.s32 %s13, 1
    $region12: #{skein_forward.4} parent=5 // pred_fallthru
      _
    %p232 = scmp.lt.s32.totalorder %s13, 4
    // Predicated region
    $region13: #{skein_forward.4} parent=5 // pred_check
      %p233 = pneg %p232
    $region14: #{skein_forward.4} parent=5 // pred_check_branch
      %235 = sbr.rel (%p233) target = $region16
    $region15: #{skein_forward.4} parent=5 // pred_region
      // Predicated region
      $region17: #{skein_forward.4} parent=15 // pred_check
        %p236 = pneg %p47
      $region18: #{skein_forward.4} parent=15 // pred_check_branch
        %238 = sbr.rel (%p236) target = $region20
      $region19: #{skein_forward.4} parent=15 // pred_region
        %p239 = scmp.lt.s32.totalorder %s20, 1
        %s240 = scalar_select %p239, %s20, 1
        %p241 = scmp.lt.s32.totalorder %s21, 1
        %s242 = scalar_select %p241, %s21, 1
        %s243 = smul.addr %s242, 16
        %s244 = smul.addr %s240, 32
        %s245 = sadd.s32 %s243, %s244
        %s246 = smul.addr %s245, 8
        %s247 = scalar_lea.vmem %s0, %s246
      $region20: #{skein_forward.4} parent=15 // pred_fallthru
        _
      // Predicated region
      $region21: #{skein_forward.4} parent=15 // pred_check
        %p248 = pneg %p75
      $region22: #{skein_forward.4} parent=15 // pred_check_branch
        %250 = sbr.rel (%p248) target = $region24
      $region23: #{skein_forward.4} parent=15 // pred_region
        %p251 = scmp.lt.s32.totalorder %s20, 1
        %s252 = scalar_select %p251, %s20, 1
        %p253 = scmp.lt.s32.totalorder %s21, 1
        %s254 = scalar_select %p253, %s21, 1
        %s255 = smul.addr %s254, 16
        %s256 = smul.addr %s252, 32
        %s257 = sadd.s32 %s255, %s256
        %s258 = smul.addr %s257, 8
        %s259 = scalar_lea.vmem %s1, %s258
      $region24: #{skein_forward.4} parent=15 // pred_fallthru
        _
      // Predicated region
      $region25: #{skein_forward.4} parent=15 // pred_check
        %p260 = pneg %p103
      $region26: #{skein_forward.4} parent=15 // pred_check_branch
        %262 = sbr.rel (%p260) target = $region28
      $region27: #{skein_forward.4} parent=15 // pred_region
        %p263 = scmp.lt.s32.totalorder %s20, 1
        %s264 = scalar_select %p263, %s20, 1
        %p265 = scmp.lt.s32.totalorder %s21, 1
        %s266 = scalar_select %p265, %s21, 1
        %s267 = smul.addr %s266, 2
        %s268 = smul.addr %s264, 4
        %s269 = sadd.s32 %s267, %s268
        %s270 = smul.addr %s269, 8
        %s271 = scalar_lea.vmem %s2, %s270
      $region28: #{skein_forward.4} parent=15 // pred_fallthru
        _
      // Predicated region
      $region29: #{skein_forward.4} parent=15 // pred_check
        %p272 = pneg %p129
      $region30: #{skein_forward.4} parent=15 // pred_check_branch
        %274 = sbr.rel (%p272) target = $region32
      $region31: #{skein_forward.4} parent=15 // pred_region
        %p275 = scmp.lt.s32.totalorder %s20, 1
        %s276 = scalar_select %p275, %s20, 1
        %s277 = smul.addr %s276, 16
        %s278 = smul.addr %s277, 8
        %s279 = scalar_lea.vmem %s3, %s278
      $region32: #{skein_forward.4} parent=15 // pred_fallthru
        _
      // Predicated region
      $region33: #{skein_forward.4} parent=15 // pred_check
        %p280 = pneg %p155
      $region34: #{skein_forward.4} parent=15 // pred_check_branch
        %282 = sbr.rel (%p280) target = $region36
      $region35: #{skein_forward.4} parent=15 // pred_region
        %p283 = scmp.lt.s32.totalorder %s20, 1
        %s284 = scalar_select %p283, %s20, 1
        %s285 = scalar_lea.vmem %s4, %s284
      $region36: #{skein_forward.4} parent=15 // pred_fallthru
        _
    $region16: #{skein_forward.4} parent=5 // pred_fallthru
      _
    %p286 = scmp.le.s32.totalorder 1, %s13
    %p287 = scmp.lt.s32.totalorder %s13, 5
    %p288 = pnand %p286, %p287
    %p289 = pneg %p288
    // Predicated region
    $region37: #{skein_forward.4} parent=5 // pred_check
      _
    $region38: #{skein_forward.4} parent=5 // pred_check_branch
      %291 = sbr.rel (%p288) target = $region40
    $region39: #{skein_forward.4} parent=5 // pred_region
      %s292 = ssub.s32 %s13, 1
      %p293 = scmp.lt.s32.totalorder %s22, 1
      %s294 = scalar_select %p293, %s22, 1
      %p295 = scmp.lt.s32.totalorder %s23, 1
      %s296 = scalar_select %p295, %s23, 1
      %s297 = smul.addr %s296, 16
      %s298 = smul.addr %s294, 32
      %s299 = sadd.s32 %s297, %s298
      %s300 = smul.addr %s299, 8
      %s301 = scalar_lea.vmem %s0, %s300
      %p302 = pneg %p53
      %p303 = pneg %p50
      %p304 = scmp.lt.s32.totalorder %s22, 1
      %s305 = scalar_select %p304, %s22, 1
      %p306 = scmp.lt.s32.totalorder %s23, 1
      %s307 = scalar_select %p306, %s23, 1
      %s308 = smul.addr %s307, 16
      %s309 = smul.addr %s305, 32
      %s310 = sadd.s32 %s308, %s309
      %s311 = smul.addr %s310, 8
      %s312 = scalar_lea.vmem %s1, %s311
      %p313 = pneg %p81
      %p314 = pneg %p78
      %p315 = scmp.lt.s32.totalorder %s22, 1
      %s316 = scalar_select %p315, %s22, 1
      %p317 = scmp.lt.s32.totalorder %s23, 1
      %s318 = scalar_select %p317, %s23, 1
      %s319 = smul.addr %s318, 2
      %s320 = smul.addr %s316, 4
      %s321 = sadd.s32 %s319, %s320
      %s322 = smul.addr %s321, 8
      %s323 = scalar_lea.vmem %s2, %s322
      %p324 = pneg %p109
      %p325 = pneg %p106
      %p326 = scmp.lt.s32.totalorder %s22, 1
      %s327 = scalar_select %p326, %s22, 1
      %s328 = smul.addr %s327, 16
      %s329 = smul.addr %s328, 8
      %s330 = scalar_lea.vmem %s3, %s329
      %p331 = pneg %p135
      %p332 = pneg %p132
      %p333 = scmp.lt.s32.totalorder %s22, 1
      %s334 = scalar_select %p333, %s22, 1
      %s335 = scalar_lea.vmem %s4, %s334
      %p336 = pneg %p161
      %p337 = pneg %p158
      %p338 = pneg %p189
      %p339 = pneg %p186
      %p340 = scmp.lt.s32.totalorder %s22, 1
      %s341 = scalar_select %p340, %s22, 1
      %p342 = scmp.lt.s32.totalorder %s23, 1
      %s343 = scalar_select %p342, %s23, 1
      %s344 = smul.addr %s341, 2
      %s345 = sadd.s32 %s343, %s344
      %s346 = scalar_lea.vmem %s5, %s345
      %p347 = pneg %p217
      %p348 = pneg %p214
      %p349 = scmp.lt.s32.totalorder %s22, 1
      %s350 = scalar_select %p349, %s22, 1
      %p351 = scmp.lt.s32.totalorder %s23, 1
      %s352 = scalar_select %p351, %s23, 1
      %s353 = smul.addr %s352, 4
      %s354 = smul.addr %s350, 8
      %s355 = sadd.s32 %s353, %s354
      %s356 = smul.addr %s355, 8
      %s357 = scalar_lea.vmem %s6, %s356
      %p358 = scmp.lt.s32.totalorder %s22, 1
      %s359 = scalar_select %p358, %s22, 1
      %p360 = scmp.lt.s32.totalorder %s23, 1
      %s361 = scalar_select %p360, %s23, 1
      %s362 = smul.addr %s361, 16
      %s363 = smul.addr %s359, 32
      %s364 = sadd.s32 %s362, %s363
      %s365 = smul.addr %s364, 8
      %s366 = scalar_lea.vmem %s0, %s365
      %p367 = scmp.lt.s32.totalorder %s22, 1
      %s368 = scalar_select %p367, %s22, 1
      %p369 = scmp.lt.s32.totalorder %s23, 1
      %s370 = scalar_select %p369, %s23, 1
      %s371 = smul.addr %s370, 16
      %s372 = smul.addr %s368, 32
      %s373 = sadd.s32 %s371, %s372
      %s374 = smul.addr %s373, 8
      %s375 = scalar_lea.vmem %s1, %s374
      %p376 = scmp.lt.s32.totalorder %s22, 1
      %s377 = scalar_select %p376, %s22, 1
      %p378 = scmp.lt.s32.totalorder %s23, 1
      %s379 = scalar_select %p378, %s23, 1
      %s380 = smul.addr %s379, 2
      %s381 = smul.addr %s377, 4
      %s382 = sadd.s32 %s380, %s381
      %s383 = smul.addr %s382, 8
      %s384 = scalar_lea.vmem %s2, %s383
      %p385 = scmp.lt.s32.totalorder %s22, 1
      %s386 = scalar_select %p385, %s22, 1
      %s387 = smul.addr %s386, 16
      %s388 = smul.addr %s387, 8
      %s389 = scalar_lea.vmem %s3, %s388
      %p390 = scmp.lt.s32.totalorder %s22, 1
      %s391 = scalar_select %p390, %s22, 1
      %s392 = scalar_lea.vmem %s4, %s391
      %p393 = scmp.lt.s32.totalorder %s22, 1
      %s394 = scalar_select %p393, %s22, 1
      %p395 = scmp.lt.s32.totalorder %s23, 1
      %s396 = scalar_select %p395, %s23, 1
      %s397 = smul.addr %s394, 2
      %s398 = sadd.s32 %s396, %s397
      %s399 = scalar_lea.vmem %s5, %s398
      %p400 = scmp.lt.s32.totalorder %s22, 1
      %s401 = scalar_select %p400, %s22, 1
      %p402 = scmp.lt.s32.totalorder %s23, 1
      %s403 = scalar_select %p402, %s23, 1
      %s404 = smul.addr %s403, 4
      %s405 = smul.addr %s401, 8
      %s406 = sadd.s32 %s404, %s405
      %s407 = smul.addr %s406, 8
      %s408 = scalar_lea.vmem %s6, %s407
      %v410 = vld [vmem:[%s366] sm:$0xff]
      %v411 = vld [vmem:[%s366 + $0x8] sm:$0xff]
      %v412 = vld [vmem:[%s366 + $0x10] sm:$0xff]
      %v413 = vld [vmem:[%s366 + $0x18] sm:$0xff]
      %v414 = vld [vmem:[%s366 + $0x20] sm:$0xff]
      %v415 = vld [vmem:[%s366 + $0x28] sm:$0xff]
      %v416 = vld [vmem:[%s366 + $0x30] sm:$0xff]
      %v417 = vld [vmem:[%s366 + $0x38] sm:$0xff]
      %v418 = vld [vmem:[%s366 + $0x40] sm:$0xff]
      %v419 = vld [vmem:[%s366 + $0x48] sm:$0xff]
      %v420 = vld [vmem:[%s366 + $0x50] sm:$0xff]
      %v421 = vld [vmem:[%s366 + $0x58] sm:$0xff]
      %v422 = vld [vmem:[%s366 + $0x60] sm:$0xff]
      %v423 = vld [vmem:[%s366 + $0x68] sm:$0xff]
      %v424 = vld [vmem:[%s366 + $0x70] sm:$0xff]
      %v425 = vld [vmem:[%s366 + $0x78] sm:$0xff]
      %v426 = vpack.c.bf16 %v411, %v410
      %v427 = vpack.c.bf16 %v413, %v412
      %v428 = vpack.c.bf16 %v415, %v414
      %v429 = vpack.c.bf16 %v417, %v416
      %v430 = vpack.c.bf16 %v419, %v418
      %v431 = vpack.c.bf16 %v421, %v420
      %v432 = vpack.c.bf16 %v423, %v422
      %v433 = vpack.c.bf16 %v425, %v424
      %v434 = vld [vmem:[%s384] sm:$0xff]
      %v435 = vld [vmem:[%s384 + $0x8] sm:$0xff]
      %v436 = vpack.c.bf16 %v435, %v434
      %vm437 = vcmask 261120
      %v439 = vsel %vm437, %v436, 0
      %v442 = vsel %vm437, %v426, 0
      %v445 = vsel %vm437, %v427, 0
      %v448 = vsel %vm437, %v428, 0
      %v451 = vsel %vm437, %v429, 0
      %v454 = vsel %vm437, %v430, 0
      %v457 = vsel %vm437, %v431, 0
      %v460 = vsel %vm437, %v432, 0
      %v463 = vsel %vm437, %v433, 0
      %465 = vmatprep.subr.bf16.mxu0 0
      %466 = vmatpush1.bf16.xpose.msra.mxu0 %v463
      %467 = vmatprep.subr.bf16.mxu0 0
      %468 = vmatpush1.bf16.xpose.msra.mxu0 %v460
      %469 = vmatprep.subr.bf16.mxu0 0
      %470 = vmatpush1.bf16.xpose.msra.mxu0 %v457
      %471 = vmatprep.subr.bf16.mxu0 0
      %472 = vmatpush1.bf16.xpose.msra.mxu0 %v454
      %473 = vmatprep.subr.bf16.mxu0 0
      %474 = vmatpush1.bf16.xpose.msra.mxu0 %v451
      %475 = vmatprep.subr.bf16.mxu0 0
      %476 = vmatpush1.bf16.xpose.msra.mxu0 %v448
      %477 = vmatprep.subr.bf16.mxu0 0
      %478 = vmatpush1.bf16.xpose.msra.mxu0 %v445
      %479 = vmatprep.subr.bf16.mxu0 0
      %480 = vmatpush1.bf16.xpose.msra.mxu0 %v442
      %481 = vmatprep.subr.bf16.mxu0 0
      %482 = vmatpush2.bf16.xpose.msra.mxu0 0
      %483 = vmatprep.subr.bf16.mxu0 0
      %484 = vmatpush2.bf16.xpose.msra.mxu0 0
      %485 = vmatprep.subr.bf16.mxu0 0
      %486 = vmatpush2.bf16.xpose.msra.mxu0 0
      %487 = vmatprep.subr.bf16.mxu0 0
      %488 = vmatpush2.bf16.xpose.msra.mxu0 0
      %489 = vmatprep.subr.bf16.mxu0 0
      %490 = vmatpush2.bf16.xpose.msra.mxu0 0
      %491 = vmatprep.subr.bf16.mxu0 0
      %492 = vmatpush2.bf16.xpose.msra.mxu0 0
      %493 = vmatprep.subr.bf16.mxu0 0
      %494 = vmatpush2.bf16.xpose.msra.mxu0 0
      %495 = vmatprep.subr.bf16.mxu0 0
      %496 = vmatpush2.bf16.xpose.msra.mxu0 0
      %497 = vmatprep.mubr.bf16.mxu0 0
      %498 = vmatmul.mubr.bf16.gmra.mxu0 %v439
      %v499 = vpop.f32.mrf.mxu0
      %v500 = vadd.f32 0.0, %v499
      %v501 = vpop.f32.mrf.mxu0
      %v502 = vpop.f32.mrf.mxu0
      %v503 = vadd.f32 0.0, %v502
      %v504 = vpop.f32.mrf.mxu0
      %505 = vdwg.mxu0
      %v506 = vmul.f32 %v500, 1.442695
      %v507 = vpow.pop %v506
      %v508 = vmul.f32 %v503, 1.442695
      %v509 = vpow.pop %v508
      %v510 = vld [vmem:[%s392] sm:$0x1]
      %v512 = vlaneseq
      %v513 = vshrl.u32 %v512, 7
      %v514 = vsub.s32 0, %v513
      %v515 = vrot.slane %v510, %v514
      %v517 = vmul.f32 %v507, %v515
      %v518 = vmul.f32 %v509, %v515
      %519 = vadd.xlane.f32.xlu0 %v517
      %v520 = vpop.xlane.xlu0 %519
      %521 = vadd.xlane.f32.xlu0 %v518
      %v522 = vpop.xlane.xlu0 %521
      %v523 = vrcp.pop %v520
      %v524 = vmul.f32 1.0, %v523
      %v525 = vrcp.pop %v522
      %v526 = vmul.f32 1.0, %v525
      %v527 = vmul.f32 %v524, %v517
      %v528 = vmul.f32 %v526, %v518
      %v529 = vmul.f32 %v527, %v527
      %v530 = vmul.f32 %v528, %v528
      %v531 = vadd.f32 %v529, %v530
      %v532 = vrot.slane %v531, 4
      %v533 = vadd.f32 %v531, %v532
      %v534 = vrot.slane %v533, 2
      %v535 = vadd.f32 %v533, %v534
      %v536 = vrot.slane %v535, 1
      %v537 = vadd.f32 %v535, %v536
      %v538 = vld [vmem:[%s375] sm:$0xff]
      %v539 = vld [vmem:[%s375 + $0x8] sm:$0xff]
      %v540 = vld [vmem:[%s375 + $0x10] sm:$0xff]
      %v541 = vld [vmem:[%s375 + $0x18] sm:$0xff]
      %v542 = vld [vmem:[%s375 + $0x20] sm:$0xff]
      %v543 = vld [vmem:[%s375 + $0x28] sm:$0xff]
      %v544 = vld [vmem:[%s375 + $0x30] sm:$0xff]
      %v545 = vld [vmem:[%s375 + $0x38] sm:$0xff]
      %v546 = vld [vmem:[%s375 + $0x40] sm:$0xff]
      %v547 = vld [vmem:[%s375 + $0x48] sm:$0xff]
      %v548 = vld [vmem:[%s375 + $0x50] sm:$0xff]
      %v549 = vld [vmem:[%s375 + $0x58] sm:$0xff]
      %v550 = vld [vmem:[%s375 + $0x60] sm:$0xff]
      %v551 = vld [vmem:[%s375 + $0x68] sm:$0xff]
      %v552 = vld [vmem:[%s375 + $0x70] sm:$0xff]
      %v553 = vld [vmem:[%s375 + $0x78] sm:$0xff]
      %v554 = vld [vmem:[%s389] sm:$0xff]
      %v555 = vld [vmem:[%s389 + $0x8] sm:$0xff]
      %v556 = vld [vmem:[%s389 + $0x10] sm:$0xff]
      %v557 = vld [vmem:[%s389 + $0x18] sm:$0xff]
      %v558 = vld [vmem:[%s389 + $0x20] sm:$0xff]
      %v559 = vld [vmem:[%s389 + $0x28] sm:$0xff]
      %v560 = vld [vmem:[%s389 + $0x30] sm:$0xff]
      %v561 = vld [vmem:[%s389 + $0x38] sm:$0xff]
      %v562 = vld [vmem:[%s389 + $0x40] sm:$0xff]
      %v563 = vld [vmem:[%s389 + $0x48] sm:$0xff]
      %v564 = vld [vmem:[%s389 + $0x50] sm:$0xff]
      %v565 = vld [vmem:[%s389 + $0x58] sm:$0xff]
      %v566 = vld [vmem:[%s389 + $0x60] sm:$0xff]
      %v567 = vld [vmem:[%s389 + $0x68] sm:$0xff]
      %v568 = vld [vmem:[%s389 + $0x70] sm:$0xff]
      %v569 = vld [vmem:[%s389 + $0x78] sm:$0xff]
      %571 = vset.pattern.permute.xlu0 0
      %572 = vperm.xlu0 %571, %v554
      %v573 = vpop.permute.xlu0 %572
      %576 = vset.pattern.permute.xlu0 0
      %577 = vperm.xlu0 %576, %v555
      %v578 = vpop.permute.xlu0 %577
      %581 = vset.pattern.permute.xlu0 0
      %582 = vperm.xlu0 %581, %v556
      %v583 = vpop.permute.xlu0 %582
      %586 = vset.pattern.permute.xlu0 0
      %587 = vperm.xlu0 %586, %v557
      %v588 = vpop.permute.xlu0 %587
      %591 = vset.pattern.permute.xlu0 0
      %592 = vperm.xlu0 %591, %v558
      %v593 = vpop.permute.xlu0 %592
      %596 = vset.pattern.permute.xlu0 0
      %597 = vperm.xlu0 %596, %v559
      %v598 = vpop.permute.xlu0 %597
      %601 = vset.pattern.permute.xlu0 0
      %602 = vperm.xlu0 %601, %v560
      %v603 = vpop.permute.xlu0 %602
      %606 = vset.pattern.permute.xlu0 0
      %607 = vperm.xlu0 %606, %v561
      %v608 = vpop.permute.xlu0 %607
      %611 = vset.pattern.permute.xlu0 0
      %612 = vperm.xlu0 %611, %v562
      %v613 = vpop.permute.xlu0 %612
      %616 = vset.pattern.permute.xlu0 0
      %617 = vperm.xlu0 %616, %v563
      %v618 = vpop.permute.xlu0 %617
      %621 = vset.pattern.permute.xlu0 0
      %622 = vperm.xlu0 %621, %v564
      %v623 = vpop.permute.xlu0 %622
      %626 = vset.pattern.permute.xlu0 0
      %627 = vperm.xlu0 %626, %v565
      %v628 = vpop.permute.xlu0 %627
      %631 = vset.pattern.permute.xlu0 0
      %632 = vperm.xlu0 %631, %v566
      %v633 = vpop.permute.xlu0 %632
      %636 = vset.pattern.permute.xlu0 0
      %637 = vperm.xlu0 %636, %v567
      %v638 = vpop.permute.xlu0 %637
      %641 = vset.pattern.permute.xlu0 0
      %642 = vperm.xlu0 %641, %v568
      %v643 = vpop.permute.xlu0 %642
      %646 = vset.pattern.permute.xlu0 0
      %647 = vperm.xlu0 %646, %v569
      %v648 = vpop.permute.xlu0 %647
      %v650 = vmul.f32 %v538, %v573
      %v651 = vmul.f32 %v539, %v578
      %v652 = vmul.f32 %v540, %v583
      %v653 = vmul.f32 %v541, %v588
      %v654 = vmul.f32 %v542, %v593
      %v655 = vmul.f32 %v543, %v598
      %v656 = vmul.f32 %v544, %v603
      %v657 = vmul.f32 %v545, %v608
      %v658 = vmul.f32 %v546, %v613
      %v659 = vmul.f32 %v547, %v618
      %v660 = vmul.f32 %v548, %v623
      %v661 = vmul.f32 %v549, %v628
      %v662 = vmul.f32 %v550, %v633
      %v663 = vmul.f32 %v551, %v638
      %v664 = vmul.f32 %v552, %v643
      %v665 = vmul.f32 %v553, %v648
      %v666 = vmul.f32 %v650, %v650
      %v667 = vmul.f32 %v651, %v651
      %v668 = vmul.f32 %v652, %v652
      %v669 = vmul.f32 %v653, %v653
      %v670 = vmul.f32 %v654, %v654
      %v671 = vmul.f32 %v655, %v655
      %v672 = vmul.f32 %v656, %v656
      %v673 = vmul.f32 %v657, %v657
      %v674 = vmul.f32 %v658, %v658
      %v675 = vmul.f32 %v659, %v659
      %v676 = vmul.f32 %v660, %v660
      %v677 = vmul.f32 %v661, %v661
      %v678 = vmul.f32 %v662, %v662
      %v679 = vmul.f32 %v663, %v663
      %v680 = vmul.f32 %v664, %v664
      %v681 = vmul.f32 %v665, %v665
      %v682 = vsel %vm437, %v666, 0.0
      %683 = vadd.xlane.f32.xlu0 %v682
      %v684 = vpop.xlane.xlu0 %683
      %v685 = vsel %vm437, %v667, 0.0
      %686 = vadd.xlane.f32.xlu0 %v685
      %v687 = vpop.xlane.xlu0 %686
      %v688 = vsel %vm437, %v668, 0.0
      %689 = vadd.xlane.f32.xlu0 %v688
      %v690 = vpop.xlane.xlu0 %689
      %v691 = vsel %vm437, %v669, 0.0
      %692 = vadd.xlane.f32.xlu0 %v691
      %v693 = vpop.xlane.xlu0 %692
      %v694 = vsel %vm437, %v670, 0.0
      %695 = vadd.xlane.f32.xlu0 %v694
      %v696 = vpop.xlane.xlu0 %695
      %v697 = vsel %vm437, %v671, 0.0
      %698 = vadd.xlane.f32.xlu0 %v697
      %v699 = vpop.xlane.xlu0 %698
      %v700 = vsel %vm437, %v672, 0.0
      %701 = vadd.xlane.f32.xlu0 %v700
      %v702 = vpop.xlane.xlu0 %701
      %v703 = vsel %vm437, %v673, 0.0
      %704 = vadd.xlane.f32.xlu0 %v703
      %v705 = vpop.xlane.xlu0 %704
      %v706 = vsel %vm437, %v674, 0.0
      %707 = vadd.xlane.f32.xlu0 %v706
      %v708 = vpop.xlane.xlu0 %707
      %v709 = vsel %vm437, %v675, 0.0
      %710 = vadd.xlane.f32.xlu0 %v709
      %v711 = vpop.xlane.xlu0 %710
      %v712 = vsel %vm437, %v676, 0.0
      %713 = vadd.xlane.f32.xlu0 %v712
      %v714 = vpop.xlane.xlu0 %713
      %v715 = vsel %vm437, %v677, 0.0
      %716 = vadd.xlane.f32.xlu0 %v715
      %v717 = vpop.xlane.xlu0 %716
      %v718 = vsel %vm437, %v678, 0.0
      %719 = vadd.xlane.f32.xlu0 %v718
      %v720 = vpop.xlane.xlu0 %719
      %v721 = vsel %vm437, %v679, 0.0
      %722 = vadd.xlane.f32.xlu0 %v721
      %v723 = vpop.xlane.xlu0 %722
      %v724 = vsel %vm437, %v680, 0.0
      %725 = vadd.xlane.f32.xlu0 %v724
      %v726 = vpop.xlane.xlu0 %725
      %v727 = vsel %vm437, %v681, 0.0
      %728 = vadd.xlane.f32.xlu0 %v727
      %v729 = vpop.xlane.xlu0 %728
      %v746 = vlaneseq
      %v747 = vand.u32 %v746, 127
      %v748 = vlaneseq
      %v749 = vshrl.u32 %v748, 7
      %v750 = vsub.s32 %v747, %v749
      %v751 = vrot.slane %v684, %v750
      %v752 = vadd.s32 %v747, 4294967288
      %v753 = vlaneseq
      %v754 = vshrl.u32 %v753, 7
      %v755 = vsub.s32 %v752, %v754
      %v756 = vrot.slane %v687, %v755
      %vm757 = vcmask 130112
      %v758 = vsel %vm757, %v756, %v751
      %v759 = vadd.s32 %v747, 4294967280
      %v760 = vlaneseq
      %v761 = vshrl.u32 %v760, 7
      %v762 = vsub.s32 %v759, %v761
      %v763 = vrot.slane %v690, %v762
      %vm764 = vcmask 195712
      %v765 = vsel %vm764, %v763, %v758
      %v766 = vadd.s32 %v747, 4294967272
      %v767 = vlaneseq
      %v768 = vshrl.u32 %v767, 7
      %v769 = vsub.s32 %v766, %v768
      %v770 = vrot.slane %v693, %v769
      %vm771 = vcmask 261312
      %v772 = vsel %vm771, %v770, %v765
      %v773 = vadd.s32 %v747, 4294967264
      %v774 = vlaneseq
      %v775 = vshrl.u32 %v774, 7
      %v776 = vsub.s32 %v773, %v775
      %v777 = vrot.slane %v696, %v776
      %vm778 = vcmask 326912
      %v779 = vsel %vm778, %v777, %v772
      %v780 = vadd.s32 %v747, 4294967256
      %v781 = vlaneseq
      %v782 = vshrl.u32 %v781, 7
      %v783 = vsub.s32 %v780, %v782
      %v784 = vrot.slane %v699, %v783
      %vm785 = vcmask 392512
      %v786 = vsel %vm785, %v784, %v779
      %v787 = vadd.s32 %v747, 4294967248
      %v788 = vlaneseq
      %v789 = vshrl.u32 %v788, 7
      %v790 = vsub.s32 %v787, %v789
      %v791 = vrot.slane %v702, %v790
      %vm792 = vcmask 458112
      %v793 = vsel %vm792, %v791, %v786
      %v794 = vadd.s32 %v747, 4294967240
      %v795 = vlaneseq
      %v796 = vshrl.u32 %v795, 7
      %v797 = vsub.s32 %v794, %v796
      %v798 = vrot.slane %v705, %v797
      %vm799 = vcmask 523712
      %v800 = vsel %vm799, %v798, %v793
      %v801 = vadd.s32 %v747, 4294967232
      %v802 = vlaneseq
      %v803 = vshrl.u32 %v802, 7
      %v804 = vsub.s32 %v801, %v803
      %v805 = vrot.slane %v708, %v804
      %vm806 = vcmask 589312
      %v807 = vsel %vm806, %v805, %v800
      %v808 = vadd.s32 %v747, 4294967224
      %v809 = vlaneseq
      %v810 = vshrl.u32 %v809, 7
      %v811 = vsub.s32 %v808, %v810
      %v812 = vrot.slane %v711, %v811
      %vm813 = vcmask 654912
      %v814 = vsel %vm813, %v812, %v807
      %v815 = vadd.s32 %v747, 4294967216
      %v816 = vlaneseq
      %v817 = vshrl.u32 %v816, 7
      %v818 = vsub.s32 %v815, %v817
      %v819 = vrot.slane %v714, %v818
      %vm820 = vcmask 720512
      %v821 = vsel %vm820, %v819, %v814
      %v822 = vadd.s32 %v747, 4294967208
      %v823 = vlaneseq
      %v824 = vshrl.u32 %v823, 7
      %v825 = vsub.s32 %v822, %v824
      %v826 = vrot.slane %v717, %v825
      %vm827 = vcmask 786112
      %v828 = vsel %vm827, %v826, %v821
      %v829 = vadd.s32 %v747, 4294967200
      %v830 = vlaneseq
      %v831 = vshrl.u32 %v830, 7
      %v832 = vsub.s32 %v829, %v831
      %v833 = vrot.slane %v720, %v832
      %vm834 = vcmask 851712
      %v835 = vsel %vm834, %v833, %v828
      %v836 = vadd.s32 %v747, 4294967192
      %v837 = vlaneseq
      %v838 = vshrl.u32 %v837, 7
      %v839 = vsub.s32 %v836, %v838
      %v840 = vrot.slane %v723, %v839
      %vm841 = vcmask 917312
      %v842 = vsel %vm841, %v840, %v835
      %v843 = vadd.s32 %v747, 4294967184
      %v844 = vlaneseq
      %v845 = vshrl.u32 %v844, 7
      %v846 = vsub.s32 %v843, %v845
      %v847 = vrot.slane %v726, %v846
      %vm848 = vcmask 982912
      %v849 = vsel %vm848, %v847, %v842
      %v850 = vadd.s32 %v747, 4294967176
      %v851 = vlaneseq
      %v852 = vshrl.u32 %v851, 7
      %v853 = vsub.s32 %v850, %v852
      %v854 = vrot.slane %v729, %v853
      %vm855 = vcmask 1048512
      %v856 = vsel %vm855, %v854, %v849
      %v858 = vmul.f32 %v537, %v856
      %v859 = vrsqrt.pop %v858
      %v860 = vmul.f32 %v858, %v859
      %vm861 = vcmp.eq.f32.partialorder %v858, inf
      %v862 = vsel %vm861, %v858, %v860
      %vm863 = vcmp.eq.f32.partialorder %v858, 0.0
      %v864 = vand.u32 %v858, 2147483648
      %v865 = vsel %vm863, %v864, %v862
      %866 = vst [vmem:[%s399] sm:$0x1] %v865
      %v867 = vsel %vm437, %v650, 0.0
      %v868 = vsel %vm437, %v651, 0.0
      %v869 = vadd.f32 %v867, %v868
      %v870 = vsel %vm437, %v652, 0.0
      %v871 = vadd.f32 %v869, %v870
      %v872 = vsel %vm437, %v653, 0.0
      %v873 = vadd.f32 %v871, %v872
      %v874 = vsel %vm437, %v654, 0.0
      %v875 = vadd.f32 %v873, %v874
      %v876 = vsel %vm437, %v655, 0.0
      %v877 = vadd.f32 %v875, %v876
      %v878 = vsel %vm437, %v656, 0.0
      %v879 = vadd.f32 %v877, %v878
      %v880 = vsel %vm437, %v657, 0.0
      %v881 = vadd.f32 %v879, %v880
      %v882 = vsel %vm437, %v658, 0.0
      %v883 = vadd.f32 %v881, %v882
      %v884 = vsel %vm437, %v659, 0.0
      %v885 = vadd.f32 %v883, %v884
      %v886 = vsel %vm437, %v660, 0.0
      %v887 = vadd.f32 %v885, %v886
      %v888 = vsel %vm437, %v661, 0.0
      %v889 = vadd.f32 %v887, %v888
      %v890 = vsel %vm437, %v662, 0.0
      %v891 = vadd.f32 %v889, %v890
      %v892 = vsel %vm437, %v663, 0.0
      %v893 = vadd.f32 %v891, %v892
      %v894 = vsel %vm437, %v664, 0.0
      %v895 = vadd.f32 %v893, %v894
      %v896 = vsel %vm437, %v665, 0.0
      %v897 = vadd.f32 %v895, %v896
      %v898 = vrot.slane %v897, 4
      %v899 = vadd.f32 %v897, %v898
      %v900 = vrot.slane %v899, 2
      %v901 = vadd.f32 %v899, %v900
      %v902 = vrot.slane %v901, 1
      %v903 = vadd.f32 %v901, %v902
      %905 = vbcast.lane.b32.xlu0 %v903, 256
      %v906 = vpop.permute.xlu0 %905
      %s908 = sor.u32 256, 8
      %909 = vbcast.lane.b32.xlu0 %v903, %s908
      %v910 = vpop.permute.xlu0 %909
      %s912 = sor.u32 256, 16
      %913 = vbcast.lane.b32.xlu0 %v903, %s912
      %v914 = vpop.permute.xlu0 %913
      %s916 = sor.u32 256, 24
      %917 = vbcast.lane.b32.xlu0 %v903, %s916
      %v918 = vpop.permute.xlu0 %917
      %vm919 = vcmask 7168
      %920 = vst.msk [vmem:[%s408] sm:$0xff] %vm919, %v906
      %921 = vst.msk [vmem:[%s408 + $0x8] sm:$0xff] %vm919, %v910
      %922 = vst.msk [vmem:[%s408 + $0x10] sm:$0xff] %vm919, %v914
      %923 = vst.msk [vmem:[%s408 + $0x18] sm:$0xff] %vm919, %v918
      %p924 = scmp.lt.s32.totalorder %s22, 1
      %s925 = scalar_select %p924, %s22, 1
      %p926 = scmp.lt.s32.totalorder %s23, 1
      %s927 = scalar_select %p926, %s23, 1
      %s928 = smul.addr %s925, 2
      %s929 = sadd.s32 %s927, %s928
      %s930 = scalar_lea.vmem %s5, %s929
      %p931 = scmp.lt.s32.totalorder %s22, 1
      %s932 = scalar_select %p931, %s22, 1
      %p933 = scmp.lt.s32.totalorder %s23, 1
      %s934 = scalar_select %p933, %s23, 1
      %s935 = smul.addr %s934, 4
      %s936 = smul.addr %s932, 8
      %s937 = sadd.s32 %s935, %s936
      %s938 = smul.addr %s937, 8
      %s939 = scalar_lea.vmem %s6, %s938
      // Predicated region
      $region41: #{skein_forward.4} parent=39 // pred_check
        %p940 = pneg %p186
      $region42: #{skein_forward.4} parent=39 // pred_check_branch
        %942 = sbr.rel (%p940) target = $region44
      $region43: #{skein_forward.4} parent=39 // pred_region
        _
      $region44: #{skein_forward.4} parent=39 // pred_fallthru
        _
      // Predicated region
      $region45: #{skein_forward.4} parent=39 // pred_check
        %p943 = pneg %p214
      $region46: #{skein_forward.4} parent=39 // pred_check_branch
        %945 = sbr.rel (%p943) target = $region48
      $region47: #{skein_forward.4} parent=39 // pred_region
        _
      $region48: #{skein_forward.4} parent=39 // pred_fallthru
        _
    $region40: #{skein_forward.4} parent=5 // pred_fallthru
      _
    %p946 = scmp.le.s32.totalorder 2, %s13
    // Predicated region
    $region49: #{skein_forward.4} parent=5 // pred_check
      %p947 = pneg %p946
    $region50: #{skein_forward.4} parent=5 // pred_check_branch
      %949 = sbr.rel (%p947) target = $region52
    $region51: #{skein_forward.4} parent=5 // pred_region
      %s950 = ssub.s32 %s13, 2
      // Predicated region
      $region53: #{skein_forward.4} parent=51 // pred_check
        %p951 = pneg %p192
      $region54: #{skein_forward.4} parent=51 // pred_check_branch
        %953 = sbr.rel (%p951) target = $region56
      $region55: #{skein_forward.4} parent=51 // pred_region
        %p954 = scmp.lt.s32.totalorder %s24, 1
        %s955 = scalar_select %p954, %s24, 1
        %p956 = scmp.lt.s32.totalorder %s25, 1
        %s957 = scalar_select %p956, %s25, 1
        %s958 = smul.addr %s955, 2
        %s959 = sadd.s32 %s957, %s958
        %s960 = scalar_lea.vmem %s5, %s959
      $region56: #{skein_forward.4} parent=51 // pred_fallthru
        _
      // Predicated region
      $region57: #{skein_forward.4} parent=51 // pred_check
        %p961 = pneg %p220
      $region58: #{skein_forward.4} parent=51 // pred_check_branch
        %963 = sbr.rel (%p961) target = $region60
      $region59: #{skein_forward.4} parent=51 // pred_region
        %p964 = scmp.lt.s32.totalorder %s24, 1
        %s965 = scalar_select %p964, %s24, 1
        %p966 = scmp.lt.s32.totalorder %s25, 1
        %s967 = scalar_select %p966, %s25, 1
        %s968 = smul.addr %s967, 4
        %s969 = smul.addr %s965, 8
        %s970 = sadd.s32 %s968, %s969
        %s971 = smul.addr %s970, 8
        %s972 = scalar_lea.vmem %s6, %s971
      $region60: #{skein_forward.4} parent=51 // pred_fallthru
        _
    $region52: #{skein_forward.4} parent=5 // pred_fallthru
      _
  $region6: #{skein_forward.4} parent=0 // loop_footer
    %s17 = sadd.s32 1, %s13
  $region7: #{skein_forward.4} parent=0 // loop_footer_branch
    %12 = sbr.rel target = $region3
  $region8: #{skein_forward.4} parent=0 // loop_exit
    _

// kernel: skein_forward.5
$region0: #{skein_forward.5}
  #allocation0 [shape = 'u32[]', space=smem, size = 0x4, offset = 0x4, fixed_abs, tag = 'smem constant byte address 0x4 - core index']
  #allocation1 [shape = 'u32[144,128]{1,0:T(1,128)}', space=vmem, size = 0x12000, scoped, tag = 'internal scratch']
  %s0 = inlined_call_operand.vmem [shape: f32[2,2,128,32], index: 0, kind: input, shape index: {}]
  %s1 = inlined_call_operand.vmem [shape: f32[2,1,128], index: 1, kind: input, shape index: {}]
  %s2 = inlined_call_operand.vmem [shape: f32[2,2,64,32], index: 2, kind: input, shape index: {}]
  %s3 = inlined_call_operand.vmem [shape: f32[2,2,64,32], index: 3, kind: input, shape index: {}]
  %s4 = inlined_call_operand.vmem [shape: f32[2,2,32,1], index: 4, kind: input, shape index: {}]
  %s5 = inlined_call_operand.vmem [shape: f32[2], index: 5, kind: input, shape index: {}]
  %s6 = inlined_call_operand.hbm [shape: f32[2,2,32,128], index: 6, kind: output, shape index: {}]
  %s7 = sld [smem:[#allocation0]]
  $region61: #{skein_forward.5} parent=0
    _
  %s9 = ssub.s32 1, %s7
  %s10 = scalar_select 0, %s9, %s7
  $region1: #{skein_forward.5} parent=0
    #allocation2 [shape = 'u8[512]{0}', space=smem, size = 0x200, scoped, tag = 'input window, operand 5, single buffered']
    #allocation3 [shape = 's32[2]{0}', space=sflag, size = 0x8, scoped, tag = 'scoped memory for skein_forward.5']
    #allocation4 [shape = 's32[2]{0}', space=sflag, size = 0x8, scoped, tag = 'scoped memory for skein_forward.5']
    #allocation5 [shape = 'u8[65536]{0}', space=vmem, size = 0x10000, scoped, tag = 'output window, operand 0']
    %11 = vsyncpa [#allocation4], 0
    %12 = vsyncpa [#allocation3], 0
    %s13 = scalar_lea.sflag [#allocation3], 1
    %14 = vsyncpa %s13, 0
    loop: start=0, step=1, limit=4
    $region2: #{skein_forward.5} parent=1 // loop_pre_header
      _
    $region3: #{skein_forward.5} parent=1 // loop_header
      %s16 = sphi 0, %s20
      %p17 = scmp.ge.s32.totalorder %s16, 4
      %s23 = sphi 0, %s35
      %s24 = sphi 0, %s31
      %s25 = sphi 0, %s23
      %s26 = sphi 0, %s24
      %s27 = sphi 0, %s25
      %s28 = sphi 0, %s26
      %s40 = sphi 0, %s42
      %s43 = sphi 0, %s40
      %s44 = sphi 0, %s43
      %s60 = sphi 0, %s44
      %s68 = sphi 0, %s70
      %s71 = sphi 0, %s68
      %s72 = sphi 0, %s71
      %s88 = sphi 0, %s72
      %s94 = sphi 0, %s96
      %s97 = sphi 0, %s94
      %s98 = sphi 0, %s97
      %s114 = sphi 0, %s98
      %s120 = sphi 0, %s122
      %s123 = sphi 0, %s120
      %s124 = sphi 0, %s123
      %s140 = sphi 0, %s124
      %s146 = sphi 0, %s148
      %s149 = sphi 0, %s146
      %s150 = sphi 0, %s149
      %s166 = sphi 0, %s150
      %s170 = sphi 0, %s170
      %s172 = sphi 0, %s170
      %s173 = sphi 0, %s172
      %s187 = sphi 0, %s173
      %s195 = sphi 0, %s197
      %s198 = sphi 0, %s195
      %s199 = sphi 0, %s198
      %s215 = sphi 0, %s199
    $region4: #{skein_forward.5} parent=1 // loop_header_branch
      %19 = sbr.rel (%p17) target = $region8
    $region5: #{skein_forward.5} parent=1 // loop_body
      %s21 = ssub.s32 %s16, 1
      %s22 = ssub.s32 %s16, 2
      %s29 = sadd.s32 1, %s24
      %p30 = scmp.ge.s32.totalorder %s29, 1
      %s31 = scalar_select %p30, 0, %s29
      %s32 = sadd.s32 1, %s23
      %s33 = scalar_select %p30, %s32, %s23
      %p34 = scmp.ge.s32.totalorder %s33, 2
      %s35 = scalar_select %p34, 0, %s33
      %s36 = ssub.s32 %s23, %s35
      %s37 = ssub.s32 %s24, %s31
      %s38 = sor.u32 %s36, %s37
      %p39 = scmp.eq.s32.totalorder %s38, 0
      %s41 = sadd.s32 %s40, 1
      %s42 = scalar_select %p39, %s40, %s41
      %p45 = pneg %p39
      %p46 = scmp.eq.s32.totalorder %s16, 1
      %p47 = por %p45, %p46
      %p48 = scmp.ne.s32.totalorder %s40, %s43
      %p49 = scmp.eq.s32.totalorder %s16, 0
      %p50 = por %p48, %p49
      %p51 = scmp.ne.s32.totalorder %s40, %s43
      %p52 = scmp.eq.s32.totalorder %s21, 1
      %p53 = por %p51, %p52
      %p54 = scmp.ne.s32.totalorder %s43, %s44
      %p55 = scmp.eq.s32.totalorder %s21, 0
      %p56 = por %p54, %p55
      %p57 = scmp.ne.s32.totalorder %s43, %s44
      %p58 = scmp.eq.s32.totalorder %s22, 1
      %p59 = por %p57, %p58
      %p61 = scmp.ne.s32.totalorder %s44, %s60
      %p62 = scmp.eq.s32.totalorder %s22, 0
      %p63 = por %p61, %p62
      %s64 = ssub.s32 %s23, %s35
      %s65 = ssub.s32 %s24, %s31
      %s66 = sor.u32 %s64, %s65
      %p67 = scmp.eq.s32.totalorder %s66, 0
      %s69 = sadd.s32 %s68, 1
      %s70 = scalar_select %p67, %s68, %s69
      %p73 = pneg %p67
      %p74 = scmp.eq.s32.totalorder %s16, 1
      %p75 = por %p73, %p74
      %p76 = scmp.ne.s32.totalorder %s68, %s71
      %p77 = scmp.eq.s32.totalorder %s16, 0
      %p78 = por %p76, %p77
      %p79 = scmp.ne.s32.totalorder %s68, %s71
      %p80 = scmp.eq.s32.totalorder %s21, 1
      %p81 = por %p79, %p80
      %p82 = scmp.ne.s32.totalorder %s71, %s72
      %p83 = scmp.eq.s32.totalorder %s21, 0
      %p84 = por %p82, %p83
      %p85 = scmp.ne.s32.totalorder %s71, %s72
      %p86 = scmp.eq.s32.totalorder %s22, 1
      %p87 = por %p85, %p86
      %p89 = scmp.ne.s32.totalorder %s72, %s88
      %p90 = scmp.eq.s32.totalorder %s22, 0
      %p91 = por %p89, %p90
      %s92 = ssub.s32 %s23, %s35
      %p93 = scmp.eq.s32.totalorder %s92, 0
      %s95 = sadd.s32 %s94, 1
      %s96 = scalar_select %p93, %s94, %s95
      %p99 = pneg %p93
      %p100 = scmp.eq.s32.totalorder %s16, 1
      %p101 = por %p99, %p100
      %p102 = scmp.ne.s32.totalorder %s94, %s97
      %p103 = scmp.eq.s32.totalorder %s16, 0
      %p104 = por %p102, %p103
      %p105 = scmp.ne.s32.totalorder %s94, %s97
      %p106 = scmp.eq.s32.totalorder %s21, 1
      %p107 = por %p105, %p106
      %p108 = scmp.ne.s32.totalorder %s97, %s98
      %p109 = scmp.eq.s32.totalorder %s21, 0
      %p110 = por %p108, %p109
      %p111 = scmp.ne.s32.totalorder %s97, %s98
      %p112 = scmp.eq.s32.totalorder %s22, 1
      %p113 = por %p111, %p112
      %p115 = scmp.ne.s32.totalorder %s98, %s114
      %p116 = scmp.eq.s32.totalorder %s22, 0
      %p117 = por %p115, %p116
      %s118 = ssub.s32 %s23, %s35
      %p119 = scmp.eq.s32.totalorder %s118, 0
      %s121 = sadd.s32 %s120, 1
      %s122 = scalar_select %p119, %s120, %s121
      %p125 = pneg %p119
      %p126 = scmp.eq.s32.totalorder %s16, 1
      %p127 = por %p125, %p126
      %p128 = scmp.ne.s32.totalorder %s120, %s123
      %p129 = scmp.eq.s32.totalorder %s16, 0
      %p130 = por %p128, %p129
      %p131 = scmp.ne.s32.totalorder %s120, %s123
      %p132 = scmp.eq.s32.totalorder %s21, 1
      %p133 = por %p131, %p132
      %p134 = scmp.ne.s32.totalorder %s123, %s124
      %p135 = scmp.eq.s32.totalorder %s21, 0
      %p136 = por %p134, %p135
      %p137 = scmp.ne.s32.totalorder %s123, %s124
      %p138 = scmp.eq.s32.totalorder %s22, 1
      %p139 = por %p137, %p138
      %p141 = scmp.ne.s32.totalorder %s124, %s140
      %p142 = scmp.eq.s32.totalorder %s22, 0
      %p143 = por %p141, %p142
      %s144 = ssub.s32 %s23, %s35
      %p145 = scmp.eq.s32.totalorder %s144, 0
      %s147 = sadd.s32 %s146, 1
      %s148 = scalar_select %p145, %s146, %s147
      %p151 = pneg %p145
      %p152 = scmp.eq.s32.totalorder %s16, 1
      %p153 = por %p151, %p152
      %p154 = scmp.ne.s32.totalorder %s146, %s149
      %p155 = scmp.eq.s32.totalorder %s16, 0
      %p156 = por %p154, %p155
      %p157 = scmp.ne.s32.totalorder %s146, %s149
      %p158 = scmp.eq.s32.totalorder %s21, 1
      %p159 = por %p157, %p158
      %p160 = scmp.ne.s32.totalorder %s149, %s150
      %p161 = scmp.eq.s32.totalorder %s21, 0
      %p162 = por %p160, %p161
      %p163 = scmp.ne.s32.totalorder %s149, %s150
      %p164 = scmp.eq.s32.totalorder %s22, 1
      %p165 = por %p163, %p164
      %p167 = scmp.ne.s32.totalorder %s150, %s166
      %p168 = scmp.eq.s32.totalorder %s22, 0
      %p169 = por %p167, %p168
      %s171 = sadd.s32 %s170, 1
      %p174 = scmp.eq.s32.totalorder %s16, 1
      %p175 = scmp.ne.s32.totalorder %s170, %s172
      %p176 = scmp.eq.s32.totalorder %s16, 0
      %p177 = por %p175, %p176
      %p178 = scmp.ne.s32.totalorder %s170, %s172
      %p179 = scmp.eq.s32.totalorder %s21, 1
      %p180 = por %p178, %p179
      %p181 = scmp.ne.s32.totalorder %s172, %s173
      %p182 = scmp.eq.s32.totalorder %s21, 0
      %p183 = por %p181, %p182
      %p184 = scmp.ne.s32.totalorder %s172, %s173
      %p185 = scmp.eq.s32.totalorder %s22, 1
      %p186 = por %p184, %p185
      %p188 = scmp.ne.s32.totalorder %s173, %s187
      %p189 = scmp.eq.s32.totalorder %s22, 0
      %p190 = por %p188, %p189
      %s191 = ssub.s32 %s23, %s35
      %s192 = ssub.s32 %s24, %s31
      %s193 = sor.u32 %s191, %s192
      %p194 = scmp.eq.s32.totalorder %s193, 0
      %s196 = sadd.s32 %s195, 1
      %s197 = scalar_select %p194, %s195, %s196
      %p200 = pneg %p194
      %p201 = scmp.eq.s32.totalorder %s16, 1
      %p202 = por %p200, %p201
      %p203 = scmp.ne.s32.totalorder %s195, %s198
      %p204 = scmp.eq.s32.totalorder %s16, 0
      %p205 = por %p203, %p204
      %p206 = scmp.ne.s32.totalorder %s195, %s198
      %p207 = scmp.eq.s32.totalorder %s21, 1
      %p208 = por %p206, %p207
      %p209 = scmp.ne.s32.totalorder %s198, %s199
      %p210 = scmp.eq.s32.totalorder %s21, 0
      %p211 = por %p209, %p210
      %p212 = scmp.ne.s32.totalorder %s198, %s199
      %p213 = scmp.eq.s32.totalorder %s22, 1
      %p214 = por %p212, %p213
      %p216 = scmp.ne.s32.totalorder %s199, %s215
      %p217 = scmp.eq.s32.totalorder %s22, 0
      %p218 = por %p216, %p217
      %p219 = scmp.le.s32.totalorder 1, %s16
      %p220 = scmp.lt.s32.totalorder %s16, 3
      %p221 = pnand %p219, %p220
      %p222 = pneg %p221
      // Predicated region
      $region9: #{skein_forward.5} parent=5 // pred_check
        _
      $region10: #{skein_forward.5} parent=5 // pred_check_branch
        %224 = sbr.rel (%p221) target = $region12
      $region11: #{skein_forward.5} parent=5 // pred_region
        %s225 = ssub.s32 %s16, 1
        // Predicated region
        $region13: #{skein_forward.5} parent=11 // pred_check
          %p226 = pneg %p183
        $region14: #{skein_forward.5} parent=11 // pred_check_branch
          %228 = sbr.rel (%p226) target = $region16
        $region15: #{skein_forward.5} parent=11 // pred_region
          %s230 = ssub.s32 16, 16
          %231 = vsyncadd [#allocation4], %s230
          %s233 = sshll.u32 %s5, 4
          %s234 = int_to_ptr.vmem [resolvable:$true] %s233
          %236 = dma.vmem_to_smem %s234, 16, [#allocation2], [#allocation4]
        $region16: #{skein_forward.5} parent=11 // pred_fallthru
          _
      $region12: #{skein_forward.5} parent=5 // pred_fallthru
        _
      %p237 = scmp.lt.s32.totalorder %s16, 2
      // Predicated region
      $region17: #{skein_forward.5} parent=5 // pred_check
        %p238 = pneg %p237
      $region18: #{skein_forward.5} parent=5 // pred_check_branch
        %240 = sbr.rel (%p238) target = $region20
      $region19: #{skein_forward.5} parent=5 // pred_region
        // Predicated region
        $region21: #{skein_forward.5} parent=19 // pred_check
          %p241 = pneg %p50
        $region22: #{skein_forward.5} parent=19 // pred_check_branch
          %243 = sbr.rel (%p241) target = $region24
        $region23: #{skein_forward.5} parent=19 // pred_region
          %s244 = smul.u32 16, %s24
          %p245 = scmp.lt.s32.totalorder %s23, 1
          %s246 = scalar_select %p245, %s23, 1
          %p247 = scmp.lt.s32.totalorder %s244, 15
          %s248 = scalar_select %p247, %s244, 15
          %s249 = smul.addr %s246, 32
          %s250 = sadd.s32 %s248, %s249
          %s251 = smul.addr %s250, 8
          %s252 = scalar_lea.vmem %s0, %s251
          %s253 = smul.u32 16, %s24
        $region24: #{skein_forward.5} parent=19 // pred_fallthru
          _
        // Predicated region
        $region25: #{skein_forward.5} parent=19 // pred_check
          %p254 = pneg %p78
        $region26: #{skein_forward.5} parent=19 // pred_check_branch
          %256 = sbr.rel (%p254) target = $region28
        $region27: #{skein_forward.5} parent=19 // pred_region
          %p257 = scmp.lt.s32.totalorder %s23, 1
          %s258 = scalar_select %p257, %s23, 1
          %p259 = scmp.lt.s32.totalorder %s24, 0
          %s260 = scalar_select %p259, %s24, 0
          %s261 = sadd.s32 %s260, %s258
          %s262 = scalar_lea.vmem %s1, %s261
        $region28: #{skein_forward.5} parent=19 // pred_fallthru
          _
        // Predicated region
        $region29: #{skein_forward.5} parent=19 // pred_check
          %p263 = pneg %p104
        $region30: #{skein_forward.5} parent=19 // pred_check_branch
          %265 = sbr.rel (%p263) target = $region32
        $region31: #{skein_forward.5} parent=19 // pred_region
          %p266 = scmp.lt.s32.totalorder %s23, 1
          %s267 = scalar_select %p266, %s23, 1
          %s268 = smul.addr %s267, 16
          %s269 = smul.addr %s268, 8
          %s270 = scalar_lea.vmem %s2, %s269
        $region32: #{skein_forward.5} parent=19 // pred_fallthru
          _
        // Predicated region
        $region33: #{skein_forward.5} parent=19 // pred_check
          %p271 = pneg %p130
        $region34: #{skein_forward.5} parent=19 // pred_check_branch
          %273 = sbr.rel (%p271) target = $region36
        $region35: #{skein_forward.5} parent=19 // pred_region
          %p274 = scmp.lt.s32.totalorder %s23, 1
          %s275 = scalar_select %p274, %s23, 1
          %s276 = smul.addr %s275, 16
          %s277 = smul.addr %s276, 8
          %s278 = scalar_lea.vmem %s3, %s277
        $region36: #{skein_forward.5} parent=19 // pred_fallthru
          _
        // Predicated region
        $region37: #{skein_forward.5} parent=19 // pred_check
          %p279 = pneg %p156
        $region38: #{skein_forward.5} parent=19 // pred_check_branch
          %281 = sbr.rel (%p279) target = $region40
        $region39: #{skein_forward.5} parent=19 // pred_region
          %p282 = scmp.lt.s32.totalorder %s23, 1
          %s283 = scalar_select %p282, %s23, 1
          %s284 = smul.addr %s283, 8
          %s285 = smul.addr %s284, 8
          %s286 = scalar_lea.vmem %s4, %s285
        $region40: #{skein_forward.5} parent=19 // pred_fallthru
          _
      $region20: #{skein_forward.5} parent=5 // pred_fallthru
        _
      %p287 = scmp.le.s32.totalorder 1, %s16
      %p288 = scmp.lt.s32.totalorder %s16, 3
      %p289 = pnand %p287, %p288
      %p290 = pneg %p289
      // Predicated region
      $region41: #{skein_forward.5} parent=5 // pred_check
        _
      $region42: #{skein_forward.5} parent=5 // pred_check_branch
        %292 = sbr.rel (%p289) target = $region44
      $region43: #{skein_forward.5} parent=5 // pred_region
        %s293 = ssub.s32 %s16, 1
        // Predicated region
        $region45: #{skein_forward.5} parent=43 // pred_check
          %p294 = pneg %p183
        $region46: #{skein_forward.5} parent=43 // pred_check_branch
          %296 = sbr.rel (%p294) target = $region48
        $region47: #{skein_forward.5} parent=43 // pred_region
          %297 = dma.done [#allocation4], 16
        $region48: #{skein_forward.5} parent=43 // pred_fallthru
          _
        %298 = sfence
        %s299 = smul.u32 16, %s26
        %p300 = scmp.lt.s32.totalorder %s25, 1
        %s301 = scalar_select %p300, %s25, 1
        %p302 = scmp.lt.s32.totalorder %s299, 15
        %s303 = scalar_select %p302, %s299, 15
        %s304 = smul.addr %s301, 32
        %s305 = sadd.s32 %s303, %s304
        %s306 = smul.addr %s305, 8
        %s307 = scalar_lea.vmem %s0, %s306
        %p308 = pneg %p56
        %p309 = pneg %p53
        %p310 = scmp.lt.s32.totalorder %s25, 1
        %s311 = scalar_select %p310, %s25, 1
        %p312 = scmp.lt.s32.totalorder %s26, 0
        %s313 = scalar_select %p312, %s26, 0
        %s314 = sadd.s32 %s313, %s311
        %s315 = scalar_lea.vmem %s1, %s314
        %p316 = pneg %p84
        %p317 = pneg %p81
        %p318 = scmp.lt.s32.totalorder %s25, 1
        %s319 = scalar_select %p318, %s25, 1
        %s320 = smul.addr %s319, 16
        %s321 = smul.addr %s320, 8
        %s322 = scalar_lea.vmem %s2, %s321
        %p323 = pneg %p110
        %p324 = pneg %p107
        %p325 = scmp.lt.s32.totalorder %s25, 1
        %s326 = scalar_select %p325, %s25, 1
        %s327 = smul.addr %s326, 16
        %s328 = smul.addr %s327, 8
        %s329 = scalar_lea.vmem %s3, %s328
        %p330 = pneg %p136
        %p331 = pneg %p133
        %p332 = scmp.lt.s32.totalorder %s25, 1
        %s333 = scalar_select %p332, %s25, 1
        %s334 = smul.addr %s333, 8
        %s335 = smul.addr %s334, 8
        %s336 = scalar_lea.vmem %s4, %s335
        %p337 = pneg %p162
        %p338 = pneg %p159
        %p339 = pneg %p183
        %p340 = pneg %p180
        %p341 = pneg %p211
        %p342 = pneg %p208
        %s343 = sand.u32 %s198, 1
        %s344 = scalar_lea.sflag [#allocation3], %s343
        %s345 = sand.u32 %s198, 1
        %s346 = smul.addr %s345, 64
        %s347 = scalar_lea.vmem [#allocation5], %s346
        %s348 = smul.u32 16, %s26
        %p349 = scmp.lt.s32.totalorder %s25, 1
        %s350 = scalar_select %p349, %s25, 1
        %p351 = scmp.lt.s32.totalorder %s348, 15
        %s352 = scalar_select %p351, %s348, 15
        %s353 = smul.addr %s350, 32
        %s354 = sadd.s32 %s352, %s353
        %s355 = smul.addr %s354, 8
        %s356 = scalar_lea.vmem %s0, %s355
        %s357 = smul.u32 16, %s26
        %p358 = scmp.lt.s32.totalorder %s25, 1
        %s359 = scalar_select %p358, %s25, 1
        %p360 = scmp.lt.s32.totalorder %s26, 0
        %s361 = scalar_select %p360, %s26, 0
        %s362 = sadd.s32 %s361, %s359
        %s363 = scalar_lea.vmem %s1, %s362
        %p364 = scmp.lt.s32.totalorder %s25, 1
        %s365 = scalar_select %p364, %s25, 1
        %s366 = smul.addr %s365, 16
        %s367 = smul.addr %s366, 8
        %s368 = scalar_lea.vmem %s2, %s367
        %p369 = scmp.lt.s32.totalorder %s25, 1
        %s370 = scalar_select %p369, %s25, 1
        %s371 = smul.addr %s370, 16
        %s372 = smul.addr %s371, 8
        %s373 = scalar_lea.vmem %s3, %s372
        %p374 = scmp.lt.s32.totalorder %s25, 1
        %s375 = scalar_select %p374, %s25, 1
        %s376 = smul.addr %s375, 8
        %s377 = smul.addr %s376, 8
        %s378 = scalar_lea.vmem %s4, %s377
        %s380 = sld [smem:[#allocation2 + %s25]]
        %v381 = vld [vmem:[%s356] sm:$0xff]
        %v382 = vld [vmem:[%s356 + $0x8] sm:$0xff]
        %v383 = vld [vmem:[%s356 + $0x10] sm:$0xff]
        %v384 = vld [vmem:[%s356 + $0x18] sm:$0xff]
        %v385 = vld [vmem:[%s356 + $0x20] sm:$0xff]
        %v386 = vld [vmem:[%s356 + $0x28] sm:$0xff]
        %v387 = vld [vmem:[%s356 + $0x30] sm:$0xff]
        %v388 = vld [vmem:[%s356 + $0x38] sm:$0xff]
        %v389 = vld [vmem:[%s356 + $0x40] sm:$0xff]
        %v390 = vld [vmem:[%s356 + $0x48] sm:$0xff]
        %v391 = vld [vmem:[%s356 + $0x50] sm:$0xff]
        %v392 = vld [vmem:[%s356 + $0x58] sm:$0xff]
        %v393 = vld [vmem:[%s356 + $0x60] sm:$0xff]
        %v394 = vld [vmem:[%s356 + $0x68] sm:$0xff]
        %v395 = vld [vmem:[%s356 + $0x70] sm:$0xff]
        %v396 = vld [vmem:[%s356 + $0x78] sm:$0xff]
        %v397 = vld [vmem:[%s356 + $0x80] sm:$0xff]
        %v398 = vld [vmem:[%s356 + $0x88] sm:$0xff]
        %v399 = vld [vmem:[%s356 + $0x90] sm:$0xff]
        %v400 = vld [vmem:[%s356 + $0x98] sm:$0xff]
        %v401 = vld [vmem:[%s356 + $0xa0] sm:$0xff]
        %v402 = vld [vmem:[%s356 + $0xa8] sm:$0xff]
        %v403 = vld [vmem:[%s356 + $0xb0] sm:$0xff]
        %v404 = vld [vmem:[%s356 + $0xb8] sm:$0xff]
        %v405 = vld [vmem:[%s356 + $0xc0] sm:$0xff]
        %v406 = vld [vmem:[%s356 + $0xc8] sm:$0xff]
        %v407 = vld [vmem:[%s356 + $0xd0] sm:$0xff]
        %v408 = vld [vmem:[%s356 + $0xd8] sm:$0xff]
        %v409 = vld [vmem:[%s356 + $0xe0] sm:$0xff]
        %v410 = vld [vmem:[%s356 + $0xe8] sm:$0xff]
        %v411 = vld [vmem:[%s356 + $0xf0] sm:$0xff]
        %v412 = vld [vmem:[%s356 + $0xf8] sm:$0xff]
        %v413 = vpack.c.bf16 %v382, %v381
        %v414 = vpack.c.bf16 %v384, %v383
        %v415 = vpack.c.bf16 %v386, %v385
        %v416 = vpack.c.bf16 %v388, %v387
        %v417 = vpack.c.bf16 %v390, %v389
        %v418 = vpack.c.bf16 %v392, %v391
        %v419 = vpack.c.bf16 %v394, %v393
        %v420 = vpack.c.bf16 %v396, %v395
        %v421 = vpack.c.bf16 %v398, %v397
        %v422 = vpack.c.bf16 %v400, %v399
        %v423 = vpack.c.bf16 %v402, %v401
        %v424 = vpack.c.bf16 %v404, %v403
        %v425 = vpack.c.bf16 %v406, %v405
        %v426 = vpack.c.bf16 %v408, %v407
        %v427 = vpack.c.bf16 %v410, %v409
        %v428 = vpack.c.bf16 %v412, %v411
        %v429 = vld [vmem:[%s368] sm:$0xff]
        %v430 = vld [vmem:[%s368 + $0x8] sm:$0xff]
        %v431 = vld [vmem:[%s368 + $0x10] sm:$0xff]
        %v432 = vld [vmem:[%s368 + $0x18] sm:$0xff]
        %v433 = vld [vmem:[%s368 + $0x20] sm:$0xff]
        %v434 = vld [vmem:[%s368 + $0x28] sm:$0xff]
        %v435 = vld [vmem:[%s368 + $0x30] sm:$0xff]
        %v436 = vld [vmem:[%s368 + $0x38] sm:$0xff]
        %v437 = vld [vmem:[%s368 + $0x40] sm:$0xff]
        %v438 = vld [vmem:[%s368 + $0x48] sm:$0xff]
        %v439 = vld [vmem:[%s368 + $0x50] sm:$0xff]
        %v440 = vld [vmem:[%s368 + $0x58] sm:$0xff]
        %v441 = vld [vmem:[%s368 + $0x60] sm:$0xff]
        %v442 = vld [vmem:[%s368 + $0x68] sm:$0xff]
        %v443 = vld [vmem:[%s368 + $0x70] sm:$0xff]
        %v444 = vld [vmem:[%s368 + $0x78] sm:$0xff]
        %v445 = vpack.c.bf16 %v430, %v429
        %v446 = vpack.c.bf16 %v432, %v431
        %v447 = vpack.c.bf16 %v434, %v433
        %v448 = vpack.c.bf16 %v436, %v435
        %v449 = vpack.c.bf16 %v438, %v437
        %v450 = vpack.c.bf16 %v440, %v439
        %v451 = vpack.c.bf16 %v442, %v441
        %v452 = vpack.c.bf16 %v444, %v443
        %v453 = vld [vmem:[%s373] sm:$0xff]
        %v454 = vld [vmem:[%s373 + $0x8] sm:$0xff]
        %v455 = vld [vmem:[%s373 + $0x10] sm:$0xff]
        %v456 = vld [vmem:[%s373 + $0x18] sm:$0xff]
        %v457 = vld [vmem:[%s373 + $0x20] sm:$0xff]
        %v458 = vld [vmem:[%s373 + $0x28] sm:$0xff]
        %v459 = vld [vmem:[%s373 + $0x30] sm:$0xff]
        %v460 = vld [vmem:[%s373 + $0x38] sm:$0xff]
        %v461 = vld [vmem:[%s373 + $0x40] sm:$0xff]
        %v462 = vld [vmem:[%s373 + $0x48] sm:$0xff]
        %v463 = vld [vmem:[%s373 + $0x50] sm:$0xff]
        %v464 = vld [vmem:[%s373 + $0x58] sm:$0xff]
        %v465 = vld [vmem:[%s373 + $0x60] sm:$0xff]
        %v466 = vld [vmem:[%s373 + $0x68] sm:$0xff]
        %v467 = vld [vmem:[%s373 + $0x70] sm:$0xff]
        %v468 = vld [vmem:[%s373 + $0x78] sm:$0xff]
        %vm469 = vcmask 261120
        %v471 = vsel %vm469, %v445, 0
        %v474 = vsel %vm469, %v446, 0
        %v477 = vsel %vm469, %v447, 0
        %v480 = vsel %vm469, %v448, 0
        %v483 = vsel %vm469, %v413, 0
        %v486 = vsel %vm469, %v414, 0
        %v489 = vsel %vm469, %v415, 0
        %v492 = vsel %vm469, %v416, 0
        %v495 = vsel %vm469, %v417, 0
        %v498 = vsel %vm469, %v418, 0
        %v501 = vsel %vm469, %v419, 0
        %v504 = vsel %vm469, %v420, 0
        %506 = vmatprep.subr.bf16.mxu0 0
        %507 = vmatpush1.bf16.xpose.msra.mxu0 %v504
        %508 = vmatprep.subr.bf16.mxu0 0
        %509 = vmatpush1.bf16.xpose.msra.mxu0 %v501
        %510 = vmatprep.subr.bf16.mxu0 0
        %511 = vmatpush1.bf16.xpose.msra.mxu0 %v498
        %512 = vmatprep.subr.bf16.mxu0 0
        %513 = vmatpush1.bf16.xpose.msra.mxu0 %v495
        %514 = vmatprep.subr.bf16.mxu0 0
        %515 = vmatpush1.bf16.xpose.msra.mxu0 %v492
        %516 = vmatprep.subr.bf16.mxu0 0
        %517 = vmatpush1.bf16.xpose.msra.mxu0 %v489
        %518 = vmatprep.subr.bf16.mxu0 0
        %519 = vmatpush1.bf16.xpose.msra.mxu0 %v486
        %520 = vmatprep.subr.bf16.mxu0 0
        %521 = vmatpush1.bf16.xpose.msra.mxu0 %v483
        %522 = vmatprep.subr.bf16.mxu0 0
        %523 = vmatpush2.bf16.xpose.msra.mxu0 0
        %524 = vmatprep.subr.bf16.mxu0 0
        %525 = vmatpush2.bf16.xpose.msra.mxu0 0
        %526 = vmatprep.subr.bf16.mxu0 0
        %527 = vmatpush2.bf16.xpose.msra.mxu0 0
        %528 = vmatprep.subr.bf16.mxu0 0
        %529 = vmatpush2.bf16.xpose.msra.mxu0 0
        %530 = vmatprep.subr.bf16.mxu0 0
        %531 = vmatpush2.bf16.xpose.msra.mxu0 0
        %532 = vmatprep.subr.bf16.mxu0 0
        %533 = vmatpush2.bf16.xpose.msra.mxu0 0
        %534 = vmatprep.subr.bf16.mxu0 0
        %535 = vmatpush2.bf16.xpose.msra.mxu0 0
        %536 = vmatprep.subr.bf16.mxu0 0
        %537 = vmatpush2.bf16.xpose.msra.mxu0 0
        %538 = vmatprep.mubr.bf16.mxu0 0
        %539 = vmatmul.mubr.bf16.gmra.mxu0 %v471
        %v540 = vpop.f32.mrf.mxu0
        %v541 = vadd.f32 0.0, %v540
        %v542 = vpop.f32.mrf.mxu0
        %v543 = vpop.f32.mrf.mxu0
        %v544 = vadd.f32 0.0, %v543
        %v545 = vpop.f32.mrf.mxu0
        %546 = vmatprep.mubr.bf16.mxu0 0
        %547 = vmatmul.mubr.bf16.gmra.mxu0 %v474
        %v548 = vpop.f32.mrf.mxu0
        %v549 = vadd.f32 0.0, %v548
        %v550 = vpop.f32.mrf.mxu0
        %v551 = vpop.f32.mrf.mxu0
        %v552 = vadd.f32 0.0, %v551
        %v553 = vpop.f32.mrf.mxu0
        %554 = vmatprep.mubr.bf16.mxu0 0
        %555 = vmatmul.mubr.bf16.gmra.mxu0 %v477
        %v556 = vpop.f32.mrf.mxu0
        %v557 = vadd.f32 0.0, %v556
        %v558 = vpop.f32.mrf.mxu0
        %v559 = vpop.f32.mrf.mxu0
        %v560 = vadd.f32 0.0, %v559
        %v561 = vpop.f32.mrf.mxu0
        %562 = vmatprep.mubr.bf16.mxu0 0
        %563 = vmatmul.mubr.bf16.gmra.mxu0 %v480
        %v564 = vpop.f32.mrf.mxu0
        %v565 = vadd.f32 0.0, %v564
        %v566 = vpop.f32.mrf.mxu0
        %v567 = vpop.f32.mrf.mxu0
        %v568 = vadd.f32 0.0, %v567
        %v569 = vpop.f32.mrf.mxu0
        %570 = vdwg.mxu0
        %v572 = vsel %vm469, %v449, 0
        %v575 = vsel %vm469, %v450, 0
        %v578 = vsel %vm469, %v451, 0
        %v581 = vsel %vm469, %v452, 0
        %v584 = vsel %vm469, %v421, 0
        %v587 = vsel %vm469, %v422, 0
        %v590 = vsel %vm469, %v423, 0
        %v593 = vsel %vm469, %v424, 0
        %v596 = vsel %vm469, %v425, 0
        %v599 = vsel %vm469, %v426, 0
        %v602 = vsel %vm469, %v427, 0
        %v605 = vsel %vm469, %v428, 0
        %607 = vmatprep.subr.bf16.mxu0 0
        %608 = vmatpush1.bf16.xpose.msra.mxu0 %v605
        %609 = vmatprep.subr.bf16.mxu0 0
        %610 = vmatpush1.bf16.xpose.msra.mxu0 %v602
        %611 = vmatprep.subr.bf16.mxu0 0
        %612 = vmatpush1.bf16.xpose.msra.mxu0 %v599
        %613 = vmatprep.subr.bf16.mxu0 0
        %614 = vmatpush1.bf16.xpose.msra.mxu0 %v596
        %615 = vmatprep.subr.bf16.mxu0 0
        %616 = vmatpush1.bf16.xpose.msra.mxu0 %v593
        %617 = vmatprep.subr.bf16.mxu0 0
        %618 = vmatpush1.bf16.xpose.msra.mxu0 %v590
        %619 = vmatprep.subr.bf16.mxu0 0
        %620 = vmatpush1.bf16.xpose.msra.mxu0 %v587
        %621 = vmatprep.subr.bf16.mxu0 0
        %622 = vmatpush1.bf16.xpose.msra.mxu0 %v584
        %623 = vmatprep.subr.bf16.mxu0 0
        %624 = vmatpush2.bf16.xpose.msra.mxu0 0
        %625 = vmatprep.subr.bf16.mxu0 0
        %626 = vmatpush2.bf16.xpose.msra.mxu0 0
        %627 = vmatprep.subr.bf16.mxu0 0
        %628 = vmatpush2.bf16.xpose.msra.mxu0 0
        %629 = vmatprep.subr.bf16.mxu0 0
        %630 = vmatpush2.bf16.xpose.msra.mxu0 0
        %631 = vmatprep.subr.bf16.mxu0 0
        %632 = vmatpush2.bf16.xpose.msra.mxu0 0
        %633 = vmatprep.subr.bf16.mxu0 0
        %634 = vmatpush2.bf16.xpose.msra.mxu0 0
        %635 = vmatprep.subr.bf16.mxu0 0
        %636 = vmatpush2.bf16.xpose.msra.mxu0 0
        %637 = vmatprep.subr.bf16.mxu0 0
        %638 = vmatpush2.bf16.xpose.msra.mxu0 0
        %639 = vmatprep.mubr.bf16.mxu0 0
        %640 = vmatmul.mubr.bf16.gmra.mxu0 %v572
        %v641 = vpop.f32.mrf.mxu0
        %v642 = vadd.f32 0.0, %v641
        %v643 = vpop.f32.mrf.mxu0
        %v644 = vpop.f32.mrf.mxu0
        %v645 = vadd.f32 0.0, %v644
        %v646 = vpop.f32.mrf.mxu0
        %647 = vmatprep.mubr.bf16.mxu0 0
        %648 = vmatmul.mubr.bf16.gmra.mxu0 %v575
        %v649 = vpop.f32.mrf.mxu0
        %v650 = vadd.f32 0.0, %v649
        %v651 = vpop.f32.mrf.mxu0
        %v652 = vpop.f32.mrf.mxu0
        %v653 = vadd.f32 0.0, %v652
        %v654 = vpop.f32.mrf.mxu0
        %655 = vmatprep.mubr.bf16.mxu0 0
        %656 = vmatmul.mubr.bf16.gmra.mxu0 %v578
        %v657 = vpop.f32.mrf.mxu0
        %v658 = vadd.f32 0.0, %v657
        %v659 = vpop.f32.mrf.mxu0
        %v660 = vpop.f32.mrf.mxu0
        %v661 = vadd.f32 0.0, %v660
        %v662 = vpop.f32.mrf.mxu0
        %663 = vmatprep.mubr.bf16.mxu0 0
        %664 = vmatmul.mubr.bf16.gmra.mxu0 %v581
        %v665 = vpop.f32.mrf.mxu0
        %v666 = vadd.f32 0.0, %v665
        %v667 = vpop.f32.mrf.mxu0
        %v668 = vpop.f32.mrf.mxu0
        %v669 = vadd.f32 0.0, %v668
        %v670 = vpop.f32.mrf.mxu0
        %671 = vdwg.mxu0
        %v672 = vld [vmem:[%s363] sm:$0x1]
        %v674 = vlaneseq
        %v675 = vshrl.u32 %v674, 7
        %v676 = vsub.s32 0, %v675
        %v677 = vrot.slane %v672, %v676
        %v679 = vmul.f32 %v541, %v677
        %v680 = vmul.f32 %v544, %v677
        %v681 = vmul.f32 %v549, %v677
        %v682 = vmul.f32 %v552, %v677
        %v683 = vmul.f32 %v557, %v677
        %v684 = vmul.f32 %v560, %v677
        %v685 = vmul.f32 %v565, %v677
        %v686 = vmul.f32 %v568, %v677
        %v687 = vmul.f32 %v642, %v677
        %v688 = vmul.f32 %v645, %v677
        %v689 = vmul.f32 %v650, %v677
        %v690 = vmul.f32 %v653, %v677
        %v691 = vmul.f32 %v658, %v677
        %v692 = vmul.f32 %v661, %v677
        %v693 = vmul.f32 %v666, %v677
        %v694 = vmul.f32 %v669, %v677
        %v695 = vmul.f32 %v679, 1.442695
        %v696 = vpow.pop %v695
        %v697 = vmul.f32 %v680, 1.442695
        %v698 = vpow.pop %v697
        %v699 = vmul.f32 %v681, 1.442695
        %v700 = vpow.pop %v699
        %v701 = vmul.f32 %v682, 1.442695
        %v702 = vpow.pop %v701
        %v703 = vmul.f32 %v683, 1.442695
        %v704 = vpow.pop %v703
        %v705 = vmul.f32 %v684, 1.442695
        %v706 = vpow.pop %v705
        %v707 = vmul.f32 %v685, 1.442695
        %v708 = vpow.pop %v707
        %v709 = vmul.f32 %v686, 1.442695
        %v710 = vpow.pop %v709
        %v711 = vmul.f32 %v687, 1.442695
        %v712 = vpow.pop %v711
        %v713 = vmul.f32 %v688, 1.442695
        %v714 = vpow.pop %v713
        %v715 = vmul.f32 %v689, 1.442695
        %v716 = vpow.pop %v715
        %v717 = vmul.f32 %v690, 1.442695
        %v718 = vpow.pop %v717
        %v719 = vmul.f32 %v691, 1.442695
        %v720 = vpow.pop %v719
        %v721 = vmul.f32 %v692, 1.442695
        %v722 = vpow.pop %v721
        %v723 = vmul.f32 %v693, 1.442695
        %v724 = vpow.pop %v723
        %v725 = vmul.f32 %v694, 1.442695
        %v726 = vpow.pop %v725
        %v727 = vadd.f32 %v696, %v698
        %v728 = vadd.f32 %v727, %v700
        %v729 = vadd.f32 %v728, %v702
        %v730 = vadd.f32 %v729, %v704
        %v731 = vadd.f32 %v730, %v706
        %v732 = vadd.f32 %v731, %v708
        %v733 = vadd.f32 %v732, %v710
        %v734 = vrot.slane %v733, 4
        %v735 = vadd.f32 %v733, %v734
        %v736 = vrot.slane %v735, 2
        %v737 = vadd.f32 %v735, %v736
        %v738 = vrot.slane %v737, 1
        %v739 = vadd.f32 %v737, %v738
        %v740 = vadd.f32 %v712, %v714
        %v741 = vadd.f32 %v740, %v716
        %v742 = vadd.f32 %v741, %v718
        %v743 = vadd.f32 %v742, %v720
        %v744 = vadd.f32 %v743, %v722
        %v745 = vadd.f32 %v744, %v724
        %v746 = vadd.f32 %v745, %v726
        %v747 = vrot.slane %v746, 4
        %v748 = vadd.f32 %v746, %v747
        %v749 = vrot.slane %v748, 2
        %v750 = vadd.f32 %v748, %v749
        %v751 = vrot.slane %v750, 1
        %v752 = vadd.f32 %v750, %v751
        %v753 = vadd.f32 %v679, %v680
        %v754 = vadd.f32 %v753, %v681
        %v755 = vadd.f32 %v754, %v682
        %v756 = vadd.f32 %v755, %v683
        %v757 = vadd.f32 %v756, %v684
        %v758 = vadd.f32 %v757, %v685
        %v759 = vadd.f32 %v758, %v686
        %v760 = vrot.slane %v759, 4
        %v761 = vadd.f32 %v759, %v760
        %v762 = vrot.slane %v761, 2
        %v763 = vadd.f32 %v761, %v762
        %v764 = vrot.slane %v763, 1
        %v765 = vadd.f32 %v763, %v764
        %v766 = vadd.f32 %v687, %v688
        %v767 = vadd.f32 %v766, %v689
        %v768 = vadd.f32 %v767, %v690
        %v769 = vadd.f32 %v768, %v691
        %v770 = vadd.f32 %v769, %v692
        %v771 = vadd.f32 %v770, %v693
        %v772 = vadd.f32 %v771, %v694
        %v773 = vrot.slane %v772, 4
        %v774 = vadd.f32 %v772, %v773
        %v775 = vrot.slane %v774, 2
        %v776 = vadd.f32 %v774, %v775
        %v777 = vrot.slane %v776, 1
        %v778 = vadd.f32 %v776, %v777
        %v779 = vmul.f32 %v765, 0.015625
        %v780 = vmul.f32 %v778, 0.015625
        %v781 = vmul.f32 %v779, 1.442695
        %v782 = vpow.pop %v781
        %v783 = vmul.f32 %v780, 1.442695
        %v784 = vpow.pop %v783
        %v785 = vpack.c.bf16 %v698, %v696
        %v786 = vpack.c.bf16 %v702, %v700
        %v787 = vpack.c.bf16 %v706, %v704
        %v788 = vpack.c.bf16 %v710, %v708
        %v789 = vpack.c.bf16 %v714, %v712
        %v790 = vpack.c.bf16 %v718, %v716
        %v791 = vpack.c.bf16 %v722, %v720
        %v792 = vpack.c.bf16 %v726, %v724
        %v793 = vpack.c.bf16 %v454, %v453
        %v794 = vpack.c.bf16 %v456, %v455
        %v795 = vpack.c.bf16 %v458, %v457
        %v796 = vpack.c.bf16 %v460, %v459
        %v797 = vpack.c.bf16 %v462, %v461
        %v798 = vpack.c.bf16 %v464, %v463
        %v799 = vpack.c.bf16 %v466, %v465
        %v800 = vpack.c.bf16 %v468, %v467
        %v801 = vsel %vm469, %v453, 0.0
        %v802 = vsel %vm469, %v454, 0.0
        %v803 = vadd.f32 %v801, %v802
        %v804 = vsel %vm469, %v455, 0.0
        %v805 = vadd.f32 %v803, %v804
        %v806 = vsel %vm469, %v456, 0.0
        %v807 = vadd.f32 %v805, %v806
        %v808 = vsel %vm469, %v457, 0.0
        %v809 = vadd.f32 %v807, %v808
        %v810 = vsel %vm469, %v458, 0.0
        %v811 = vadd.f32 %v809, %v810
        %v812 = vsel %vm469, %v459, 0.0
        %v813 = vadd.f32 %v811, %v812
        %v814 = vsel %vm469, %v460, 0.0
        %v815 = vadd.f32 %v813, %v814
        %v816 = vrot.slane %v815, 4
        %v817 = vadd.f32 %v815, %v816
        %v818 = vrot.slane %v817, 2
        %v819 = vadd.f32 %v817, %v818
        %v820 = vrot.slane %v819, 1
        %v821 = vadd.f32 %v819, %v820
        %v822 = vsel %vm469, %v461, 0.0
        %v823 = vsel %vm469, %v462, 0.0
        %v824 = vadd.f32 %v822, %v823
        %v825 = vsel %vm469, %v463, 0.0
        %v826 = vadd.f32 %v824, %v825
        %v827 = vsel %vm469, %v464, 0.0
        %v828 = vadd.f32 %v826, %v827
        %v829 = vsel %vm469, %v465, 0.0
        %v830 = vadd.f32 %v828, %v829
        %v831 = vsel %vm469, %v466, 0.0
        %v832 = vadd.f32 %v830, %v831
        %v833 = vsel %vm469, %v467, 0.0
        %v834 = vadd.f32 %v832, %v833
        %v835 = vsel %vm469, %v468, 0.0
        %v836 = vadd.f32 %v834, %v835
        %v837 = vrot.slane %v836, 4
        %v838 = vadd.f32 %v836, %v837
        %v839 = vrot.slane %v838, 2
        %v840 = vadd.f32 %v838, %v839
        %v841 = vrot.slane %v840, 1
        %v842 = vadd.f32 %v840, %v841
        %844 = vbcast.lane.b32.xlu0 %v821, 256
        %v845 = vpop.permute.xlu0 %844
        %s847 = sor.u32 256, 8
        %848 = vbcast.lane.b32.xlu0 %v821, %s847
        %v849 = vpop.permute.xlu0 %848
        %s851 = sor.u32 256, 16
        %852 = vbcast.lane.b32.xlu0 %v821, %s851
        %v853 = vpop.permute.xlu0 %852
        %s855 = sor.u32 256, 24
        %856 = vbcast.lane.b32.xlu0 %v821, %s855
        %v857 = vpop.permute.xlu0 %856
        %859 = vbcast.lane.b32.xlu0 %v842, 256
        %v860 = vpop.permute.xlu0 %859
        %s862 = sor.u32 256, 8
        %863 = vbcast.lane.b32.xlu0 %v842, %s862
        %v864 = vpop.permute.xlu0 %863
        %s866 = sor.u32 256, 16
        %867 = vbcast.lane.b32.xlu0 %v842, %s866
        %v868 = vpop.permute.xlu0 %867
        %s870 = sor.u32 256, 24
        %871 = vbcast.lane.b32.xlu0 %v842, %s870
        %v872 = vpop.permute.xlu0 %871
        %v873 = vld [vmem:[%s378] sm:$0xff]
        %v874 = vld [vmem:[%s378 + $0x8] sm:$0xff]
        %v875 = vld [vmem:[%s378 + $0x10] sm:$0xff]
        %v876 = vld [vmem:[%s378 + $0x18] sm:$0xff]
        %v877 = vld [vmem:[%s378 + $0x20] sm:$0xff]
        %v878 = vld [vmem:[%s378 + $0x28] sm:$0xff]
        %v879 = vld [vmem:[%s378 + $0x30] sm:$0xff]
        %v880 = vld [vmem:[%s378 + $0x38] sm:$0xff]
        %v881 = vsub.f32 %v873, %v845
        %v882 = vsub.f32 %v874, %v849
        %v883 = vsub.f32 %v875, %v853
        %v884 = vsub.f32 %v876, %v857
        %v885 = vsub.f32 %v877, %v860
        %v886 = vsub.f32 %v878, %v864
        %v887 = vsub.f32 %v879, %v868
        %v888 = vsub.f32 %v880, %v872
        %890 = vset.pattern.permute.xlu0 0
        %891 = vperm.xlu0 %890, %v881
        %v892 = vpop.permute.xlu0 %891
        %895 = vset.pattern.permute.xlu0 0
        %896 = vperm.xlu0 %895, %v882
        %v897 = vpop.permute.xlu0 %896
        %900 = vset.pattern.permute.xlu0 0
        %901 = vperm.xlu0 %900, %v883
        %v902 = vpop.permute.xlu0 %901
        %905 = vset.pattern.permute.xlu0 0
        %906 = vperm.xlu0 %905, %v884
        %v907 = vpop.permute.xlu0 %906
        %910 = vset.pattern.permute.xlu0 0
        %911 = vperm.xlu0 %910, %v885
        %v912 = vpop.permute.xlu0 %911
        %915 = vset.pattern.permute.xlu0 0
        %916 = vperm.xlu0 %915, %v886
        %v917 = vpop.permute.xlu0 %916
        %920 = vset.pattern.permute.xlu0 0
        %921 = vperm.xlu0 %920, %v887
        %v922 = vpop.permute.xlu0 %921
        %925 = vset.pattern.permute.xlu0 0
        %926 = vperm.xlu0 %925, %v888
        %v927 = vpop.permute.xlu0 %926
        %v929 = vmul.f32 %v782, %v892
        %v930 = vmul.f32 %v782, %v897
        %v931 = vmul.f32 %v782, %v902
        %v932 = vmul.f32 %v782, %v907
        %v933 = vmul.f32 %v784, %v912
        %v934 = vmul.f32 %v784, %v917
        %v935 = vmul.f32 %v784, %v922
        %v936 = vmul.f32 %v784, %v927
        %937 = vxpose.xlu0.c.b16.start [1/8] %v793, 128
        %938 = vxpose.xlu0.c.b16.cont [2/8] %v794, 128
        %939 = vxpose.xlu0.c.b16.cont [3/8] %v795, 128
        %940 = vxpose.xlu0.c.b16.cont [4/8] %v796, 128
        %941 = vxpose.xlu0.c.b16.cont [5/8] 0, 128
        %942 = vxpose.xlu0.c.b16.cont [6/8] 0, 128
        %943 = vxpose.xlu0.c.b16.cont [7/8] 0, 128
        %944 = vxpose.xlu0.c.b16.end [8/8] 0, 128
        %v945 = vpop.trf.xlu0
        %v946 = vpop.trf.xlu0
        %v947 = vpop.trf.xlu0
        %v948 = vpop.trf.xlu0
        %v949 = vpop.trf.xlu0
        %v950 = vpop.trf.xlu0
        %v951 = vpop.trf.xlu0
        %v952 = vpop.trf.xlu0
        %vm953 = vcmask 523264
        %v955 = vsel %vm953, %v945, 0
        %v958 = vsel %vm953, %v946, 0
        %960 = vmatprep.subr.bf16.mxu0 0
        %961 = vmatpush1.bf16.msra.mxu0 0
        %962 = vmatprep.subr.bf16.mxu0 0
        %963 = vmatpush1.bf16.msra.mxu0 0
        %964 = vmatprep.subr.bf16.mxu0 0
        %965 = vmatpush1.bf16.msra.mxu0 0
        %966 = vmatprep.subr.bf16.mxu0 0
        %967 = vmatpush1.bf16.msra.mxu0 0
        %968 = vmatprep.subr.bf16.mxu0 0
        %969 = vmatpush1.bf16.msra.mxu0 %v788
        %970 = vmatprep.subr.bf16.mxu0 0
        %971 = vmatpush1.bf16.msra.mxu0 %v787
        %972 = vmatprep.subr.bf16.mxu0 0
        %973 = vmatpush1.bf16.msra.mxu0 %v786
        %974 = vmatprep.subr.bf16.mxu0 0
        %975 = vmatpush1.bf16.msra.mxu0 %v785
        %976 = vmatprep.subr.bf16.mxu0 0
        %977 = vmatpush2.bf16.msra.mxu0 0
        %978 = vmatprep.subr.bf16.mxu0 0
        %979 = vmatpush2.bf16.msra.mxu0 0
        %980 = vmatprep.subr.bf16.mxu0 0
        %981 = vmatpush2.bf16.msra.mxu0 0
        %982 = vmatprep.subr.bf16.mxu0 0
        %983 = vmatpush2.bf16.msra.mxu0 0
        %984 = vmatprep.subr.bf16.mxu0 0
        %985 = vmatpush2.bf16.msra.mxu0 0
        %986 = vmatprep.subr.bf16.mxu0 0
        %987 = vmatpush2.bf16.msra.mxu0 0
        %988 = vmatprep.subr.bf16.mxu0 0
        %989 = vmatpush2.bf16.msra.mxu0 0
        %990 = vmatprep.subr.bf16.mxu0 0
        %991 = vmatpush2.bf16.msra.mxu0 0
        %992 = vmatprep.mubr.bf16.mxu0 0
        %993 = vmatmul.mubr.bf16.gmra.mxu0 %v955
        %v994 = vpop.f32.mrf.mxu0
        %v995 = vadd.f32 %v929, %v994
        %v996 = vpop.f32.mrf.mxu0
        %v997 = vpop.f32.mrf.mxu0
        %v998 = vadd.f32 %v930, %v997
        %v999 = vpop.f32.mrf.mxu0
        %1000 = vmatprep.mubr.bf16.mxu0 0
        %1001 = vmatmul.mubr.bf16.gmra.mxu0 %v958
        %v1002 = vpop.f32.mrf.mxu0
        %v1003 = vadd.f32 %v931, %v1002
        %v1004 = vpop.f32.mrf.mxu0
        %v1005 = vpop.f32.mrf.mxu0
        %v1006 = vadd.f32 %v932, %v1005
        %v1007 = vpop.f32.mrf.mxu0
        %1008 = vdwg.mxu0
        %1009 = vxpose.xlu0.c.b16.start [1/8] %v797, 128
        %1010 = vxpose.xlu0.c.b16.cont [2/8] %v798, 128
        %1011 = vxpose.xlu0.c.b16.cont [3/8] %v799, 128
        %1012 = vxpose.xlu0.c.b16.cont [4/8] %v800, 128
        %1013 = vxpose.xlu0.c.b16.cont [5/8] 0, 128
        %1014 = vxpose.xlu0.c.b16.cont [6/8] 0, 128
        %1015 = vxpose.xlu0.c.b16.cont [7/8] 0, 128
        %1016 = vxpose.xlu0.c.b16.end [8/8] 0, 128
        %v1017 = vpop.trf.xlu0
        %v1018 = vpop.trf.xlu0
        %v1019 = vpop.trf.xlu0
        %v1020 = vpop.trf.xlu0
        %v1021 = vpop.trf.xlu0
        %v1022 = vpop.trf.xlu0
        %v1023 = vpop.trf.xlu0
        %v1024 = vpop.trf.xlu0
        %v1026 = vsel %vm953, %v1017, 0
        %v1029 = vsel %vm953, %v1018, 0
        %1031 = vmatprep.subr.bf16.mxu0 0
        %1032 = vmatpush1.bf16.msra.mxu0 0
        %1033 = vmatprep.subr.bf16.mxu0 0
        %1034 = vmatpush1.bf16.msra.mxu0 0
        %1035 = vmatprep.subr.bf16.mxu0 0
        %1036 = vmatpush1.bf16.msra.mxu0 0
        %1037 = vmatprep.subr.bf16.mxu0 0
        %1038 = vmatpush1.bf16.msra.mxu0 0
        %1039 = vmatprep.subr.bf16.mxu0 0
        %1040 = vmatpush1.bf16.msra.mxu0 %v792
        %1041 = vmatprep.subr.bf16.mxu0 0
        %1042 = vmatpush1.bf16.msra.mxu0 %v791
        %1043 = vmatprep.subr.bf16.mxu0 0
        %1044 = vmatpush1.bf16.msra.mxu0 %v790
        %1045 = vmatprep.subr.bf16.mxu0 0
        %1046 = vmatpush1.bf16.msra.mxu0 %v789
        %1047 = vmatprep.subr.bf16.mxu0 0
        %1048 = vmatpush2.bf16.msra.mxu0 0
        %1049 = vmatprep.subr.bf16.mxu0 0
        %1050 = vmatpush2.bf16.msra.mxu0 0
        %1051 = vmatprep.subr.bf16.mxu0 0
        %1052 = vmatpush2.bf16.msra.mxu0 0
        %1053 = vmatprep.subr.bf16.mxu0 0
        %1054 = vmatpush2.bf16.msra.mxu0 0
        %1055 = vmatprep.subr.bf16.mxu0 0
        %1056 = vmatpush2.bf16.msra.mxu0 0
        %1057 = vmatprep.subr.bf16.mxu0 0
        %1058 = vmatpush2.bf16.msra.mxu0 0
        %1059 = vmatprep.subr.bf16.mxu0 0
        %1060 = vmatpush2.bf16.msra.mxu0 0
        %1061 = vmatprep.subr.bf16.mxu0 0
        %1062 = vmatpush2.bf16.msra.mxu0 0
        %1063 = vmatprep.mubr.bf16.mxu0 0
        %1064 = vmatmul.mubr.bf16.gmra.mxu0 %v1026
        %v1065 = vpop.f32.mrf.mxu0
        %v1066 = vadd.f32 %v933, %v1065
        %v1067 = vpop.f32.mrf.mxu0
        %v1068 = vpop.f32.mrf.mxu0
        %v1069 = vadd.f32 %v934, %v1068
        %v1070 = vpop.f32.mrf.mxu0
        %1071 = vmatprep.mubr.bf16.mxu0 0
        %1072 = vmatmul.mubr.bf16.gmra.mxu0 %v1029
        %v1073 = vpop.f32.mrf.mxu0
        %v1074 = vadd.f32 %v935, %v1073
        %v1075 = vpop.f32.mrf.mxu0
        %v1076 = vpop.f32.mrf.mxu0
        %v1077 = vadd.f32 %v936, %v1076
        %v1078 = vpop.f32.mrf.mxu0
        %1079 = vdwg.mxu0
        %v1080 = vstv %s380
        %v1081 = vmul.f32 %v782, %v1080
        %v1082 = vmul.f32 %v784, %v1080
        %v1083 = vadd.f32 %v739, %v1081
        %v1084 = vadd.f32 %v752, %v1082
        %v1085 = vrcp.pop %v1083
        %v1086 = vmul.f32 1.0, %v1085
        %v1087 = vrcp.pop %v1084
        %v1088 = vmul.f32 1.0, %v1087
        %v1089 = vmul.f32 %v995, %v1086
        %v1090 = vmul.f32 %v998, %v1086
        %v1091 = vmul.f32 %v1003, %v1086
        %v1092 = vmul.f32 %v1006, %v1086
        %v1093 = vmul.f32 %v1066, %v1088
        %v1094 = vmul.f32 %v1069, %v1088
        %v1095 = vmul.f32 %v1074, %v1088
        %v1096 = vmul.f32 %v1077, %v1088
        %1097 = vst [vmem:[%s347] sm:$0xff] %v1089
        %1098 = vst [vmem:[%s347 + $0x8] sm:$0xff] %v1090
        %1099 = vst [vmem:[%s347 + $0x10] sm:$0xff] %v1091
        %1100 = vst [vmem:[%s347 + $0x18] sm:$0xff] %v1092
        %1101 = vst [vmem:[%s347 + $0x20] sm:$0xff] %v1093
        %1102 = vst [vmem:[%s347 + $0x28] sm:$0xff] %v1094
        %1103 = vst [vmem:[%s347 + $0x30] sm:$0xff] %v1095
        %1104 = vst [vmem:[%s347 + $0x38] sm:$0xff] %v1096
        %s1105 = sand.u32 %s198, 1
        %s1106 = scalar_lea.sflag [#allocation3], %s1105
        %s1107 = sand.u32 %s198, 1
        %s1108 = smul.addr %s1107, 64
        %s1109 = scalar_lea.vmem [#allocation5], %s1108
        // Predicated region
        $region49: #{skein_forward.5} parent=43 // pred_check
          %p1110 = pneg %p208
        $region50: #{skein_forward.5} parent=43 // pred_check_branch
          %1112 = sbr.rel (%p1110) target = $region52
        $region51: #{skein_forward.5} parent=43 // pred_region
          %s1114 = ssub.s32 1024, 1024
          %1115 = vsyncadd %s1106, %s1114
          %s1116 = smul.addr %s25, 8
          %s1117 = sadd.s32 %s26, %s1116
          %s1118 = smul.addr %s1117, 128
          %s1119 = scalar_lea.hbm %s6, %s1118
          %s1120 = sshll.u32 %s1109, 4
          %s1121 = int_to_ptr.vmem [resolvable:$true] %s1120
          %1126 = dma.vmem_to_hbm [thread:$0]  %s1121, 1024, %s1119, %s1106, 128, 128, 8
        $region52: #{skein_forward.5} parent=43 // pred_fallthru
          _
      $region44: #{skein_forward.5} parent=5 // pred_fallthru
        _
      %p1127 = scmp.le.s32.totalorder 2, %s16
      // Predicated region
      $region53: #{skein_forward.5} parent=5 // pred_check
        %p1128 = pneg %p1127
      $region54: #{skein_forward.5} parent=5 // pred_check_branch
        %1130 = sbr.rel (%p1128) target = $region56
      $region55: #{skein_forward.5} parent=5 // pred_region
        %s1131 = ssub.s32 %s16, 2
        // Predicated region
        $region57: #{skein_forward.5} parent=55 // pred_check
          %p1132 = pneg %p214
        $region58: #{skein_forward.5} parent=55 // pred_check_branch
          %1134 = sbr.rel (%p1132) target = $region60
        $region59: #{skein_forward.5} parent=55 // pred_region
          %s1135 = sand.u32 %s199, 1
          %s1136 = scalar_lea.sflag [#allocation3], %s1135
          %s1137 = sand.u32 %s199, 1
          %s1138 = smul.addr %s1137, 64
          %s1139 = scalar_lea.vmem [#allocation5], %s1138
          %1140 = dma.done %s1136, 1024
        $region60: #{skein_forward.5} parent=55 // pred_fallthru
          _
      $region56: #{skein_forward.5} parent=5 // pred_fallthru
        _
    $region6: #{skein_forward.5} parent=1 // loop_footer
      %s20 = sadd.s32 1, %s16
    $region7: #{skein_forward.5} parent=1 // loop_footer_branch
      %15 = sbr.rel target = $region3
    $region8: #{skein_forward.5} parent=1 // loop_exit
      _
    %1141 = vsyncpa [#allocation3], 1
    %s1142 = scalar_lea.sflag [#allocation3], 1
    %1143 = vsyncpa %s1142, 1
    %1144 = vsyncpa [#allocation4], 1
    %s1145 = scalar_lea.sflag [#allocation4], 1
    %1146 = vsyncpa %s1145, 1

</llo_original>
